<compile_context>
chip_gen: v7x
topology: tpu7x:2x2x1
jax: 0.10.0
libtpu: 0.0.40
codegen_flags: <defaults>
</compile_context>

<pallas_src>
import jax
import jax.numpy as jnp
import numpy as np
from jax import lax
from jax.experimental import pallas as pl
from jax.experimental.pallas import tpu as pltpu

_EPS = 1e-5  # PyTorch InstanceNorm2d default


def spade_forward(x_nchw, seg_nchw, w_sh, b_sh, w_gamma, b_gamma, w_beta,
                  b_beta, *, mxu_dtype=jnp.bfloat16):
    """SPADE forward. x: (N,C,H,W); segmap: (N,nc_style,2H,2W); weights OIHW."""
    N, C, H, W = x_nchw.shape
    hidden, nc_style = int(w_sh.shape[0]), int(w_sh.shape[1])
    HW = H * W
    assert seg_nchw.shape[2] == 2 * H and seg_nchw.shape[3] == 2 * W, (
        "SPADE.forward requires segmap spatial == 2x of x's so the stride-2 "
        "mlp_shared output broadcasts against x.")

    itm = jnp.dtype(mxu_dtype).itemsize

    # ---------------- wrapper-side layout plumbing (no real FLOPs) ----------------
    # x / out stay channels-first with flattened spatial: a pure reshape of NCHW.
    x3 = x_nchw.reshape(N, C, HW).astype(jnp.float32)

    # segmap: 3x3 / stride-2 / pad-1 patch extraction, channels-first:
    # segp[n, i*9 + kh*3 + kw, y*W + x] = seg_pad[n, i, 2y+kh, 2x+kw]
    seg_pad = jnp.pad(seg_nchw, ((0, 0), (0, 0), (1, 1), (1, 1)))
    slabs = [seg_pad[:, :, kh:kh + 2 * H:2, kw:kw + 2 * W:2]
             for kh in range(3) for kw in range(3)]                 # each (N,3,H,W)
    segp = jnp.stack(slabs, axis=2).reshape(N, 9 * nc_style, HW).astype(mxu_dtype)

    # mlp_shared weight: OIHW -> (hidden, 9*nc_style), row order (i, kh, kw).
    wsh_f = w_sh.reshape(hidden, 9 * nc_style).astype(mxu_dtype)
    bsh2 = b_sh.reshape(hidden, 1).astype(jnp.float32)

    # Fused gamma+beta per-tap weights: (9, 2C, hidden); "+1" folded into gamma bias.
    def oihw_to_taps(w):  # (C, hidden, 3, 3) -> (9, C, hidden), tap = kh*3+kw
        return jnp.transpose(w, (2, 3, 0, 1)).reshape(9, C, hidden)

    wgb = jnp.concatenate([oihw_to_taps(w_gamma), oihw_to_taps(w_beta)],
                          axis=1).astype(mxu_dtype)                  # (9, 2C, hidden)
    bgb = jnp.concatenate([b_gamma + 1.0, b_beta]).reshape(2 * C, 1).astype(jnp.float32)

    # lane-aligned zero extension of the flattened actv (>= W+1 on each side)
    PAD = ((W + 1 + 127) // 128) * 128

    # ------------------------------------ kernel ------------------------------------
    def kernel(x_ref, segp_ref, wsh_ref, bsh_ref, wgb_ref, bgb_ref, out_ref):
        # InstanceNorm2d: per-channel mean / biased variance over the plane.
        x = x_ref[0]                                           # (C, HW) f32
        mean = jnp.mean(x, axis=1, keepdims=True)              # (C, 1)
        xc = x - mean
        var = jnp.mean(xc * xc, axis=1, keepdims=True)
        normalized = xc * lax.rsqrt(var + _EPS)

        # mlp_shared: ONE matmul (hidden, 27) @ (27, HW) + bias + ReLU.
        actv = jnp.dot(wsh_ref[...], segp_ref[0],
                       preferred_element_type=jnp.float32) + bsh_ref[...]
        actv = jnp.maximum(actv, 0.0).astype(mxu_dtype)        # (hidden, HW)

        # Zero-extend the flattened spatial axis so every 3x3 tap is an
        # in-bounds STATIC lane slice (no pad scratch, no 9-way concat).
        zpad = jnp.zeros((hidden, PAD), mxu_dtype)
        padded = jnp.concatenate([zpad, actv, zpad], axis=1)   # (hidden, HW+2*PAD)

        # Image-border validity masks for the shifted (flattened) taps.
        e = lax.broadcasted_iota(jnp.int32, (1, HW), 1)
        col = (e & (W - 1)) if (W & (W - 1)) == 0 else lax.rem(e, W)
        ok_up = e >= W                  # valid when dy = -1 (y >= 1)
        ok_dn = e < HW - W              # valid when dy = +1 (y <= H-2)
        ok_l = col >= 1                 # valid when dx = -1
        ok_r = col <= W - 2             # valid when dx = +1

        # Fused gamma+beta conv: accumulate 9 per-tap MXU dots into (2C, HW) f32.
        acc = jnp.zeros((2 * C, HW), jnp.float32)
        t = 0
        for dy in (-1, 0, 1):
            for dx in (-1, 0, 1):
                start = PAD + dy * W + dx
                shifted = padded[:, start:start + HW]          # (hidden, HW)
                mask = None
                if dy == -1:
                    mask = ok_up
                elif dy == 1:
                    mask = ok_dn
                if dx == -1:
                    mask = ok_l if mask is None else mask & ok_l
                elif dx == 1:
                    mask = ok_r if mask is None else mask & ok_r
                tap = shifted if mask is None else jnp.where(
                    mask, shifted, jnp.zeros_like(shifted))
                acc = acc + jnp.dot(wgb_ref[t], tap,
                                    preferred_element_type=jnp.float32)
                t += 1

        res = acc + bgb_ref[...]                               # (2C, HW)
        gamma1p = res[:C]                                      # 1 + gamma (bias-folded)
        beta = res[C:]
        out_ref[0] = normalized * gamma1p + beta

    # ---------------------------- cost / VMEM bookkeeping ----------------------------
    flops = N * (2 * HW * (9 * nc_style) * hidden              # mlp_shared
                 + 2 * HW * (9 * hidden) * (2 * C)             # fused gamma+beta
                 + 12 * HW * C + 2 * HW * hidden)              # norm / relu / affine
    bytes_accessed = int(4 * N * C * HW * 2                    # x in, out
                         + itm * N * 9 * nc_style * HW         # seg patches
                         + itm * (hidden * 9 * nc_style + 9 * 2 * C * hidden)
                         + 4 * (hidden + 2 * C))

    blk_bytes = 2 * 4 * C * HW + itm * 9 * nc_style * HW       # x + out + segp blocks
    wt_bytes = itm * (hidden * 9 * nc_style + 9 * 2 * C * hidden) + 4 * (hidden + 2 * C)
    tmp_bytes = 3 * itm * hidden * (HW + 2 * PAD) + 4 * (2 * C + 2 * C) * HW
    vmem_limit = int(min(100 * 2**20,
                         max(32 * 2**20, 2 * (2 * blk_bytes + 2 * wt_bytes + tmp_bytes))))

    out3 = pl.pallas_call(
        kernel,
        out_shape=jax.ShapeDtypeStruct((N, C, HW), jnp.float32),
        grid=(N,),
        in_specs=[
            pl.BlockSpec((1, C, HW), lambda n: (n, 0, 0)),                 # x
            pl.BlockSpec((1, 9 * nc_style, HW), lambda n: (n, 0, 0)),      # seg patches
            pl.BlockSpec((hidden, 9 * nc_style), lambda n: (0, 0)),        # w_shared
            pl.BlockSpec((hidden, 1), lambda n: (0, 0)),                   # b_shared
            pl.BlockSpec((9, 2 * C, hidden), lambda n: (0, 0, 0)),         # w_gamma|beta
            pl.BlockSpec((2 * C, 1), lambda n: (0, 0)),                    # b_gamma+1|beta
        ],
        out_specs=pl.BlockSpec((1, C, HW), lambda n: (n, 0, 0)),
        compiler_params=pltpu.CompilerParams(
            dimension_semantics=("parallel",),
            vmem_limit_bytes=vmem_limit),
        cost_estimate=pl.CostEstimate(
            flops=flops, transcendentals=N * C, bytes_accessed=bytes_accessed),
    )(x3, segp, wsh_f, bsh2, wgb, bgb)

    return out3.reshape(N, C, H, W)                            # already NCHW


def _reference_nchw(x, seg, w_sh, b_sh, w_gamma, b_gamma, w_beta, b_beta,
                    conv_dtype=jnp.float32):
    """Plain-JAX NCHW reference. conv_dtype=bf16 emulates bf16 MXU operands."""
    mean = jnp.mean(x, axis=(2, 3), keepdims=True)
    var = jnp.mean((x - mean) ** 2, axis=(2, 3), keepdims=True)
    normalized = (x - mean) * lax.rsqrt(var + _EPS)

    highest = jnp.dtype(conv_dtype) == jnp.dtype(jnp.float32)
    prec = lax.Precision.HIGHEST if highest else lax.Precision.DEFAULT

    def conv(inp, w, b, stride):
        y = lax.conv_general_dilated(
            inp.astype(conv_dtype), w.astype(conv_dtype), (stride, stride),
            ((1, 1), (1, 1)), dimension_numbers=("NCHW", "OIHW", "NCHW"),
            preferred_element_type=jnp.float32, precision=prec)
        return y + b[None, :, None, None]

    actv = jnp.maximum(conv(seg, w_sh, b_sh, 2), 0.0)
    gamma = conv(actv, w_gamma, b_gamma, 1)
    beta = conv(actv, w_beta, b_beta, 1)
    return normalized * (1.0 + gamma) + beta


if __name__ == "__main__":
    # Small config implied by the forward: nc_in=4, nc_hidden=32, nc_style=3,
    # x spatial 16x16 -> segmap 32x32, batch 2.
    N, C_in, H, W = 2, 4, 16, 16
    hidden, nc_style = 32, 3

    key = jax.random.PRNGKey(0)
    ks = jax.random.split(key, 8)

    x_nchw = jax.random.normal(ks[0], (N, C_in, H, W), jnp.float32)
    seg_nchw = jax.random.normal(ks[1], (N, nc_style, 2 * H, 2 * W), jnp.float32)
    w_sh = 0.1 * jax.random.normal(ks[2], (hidden, nc_style, 3, 3), jnp.float32)
    b_sh = 0.1 * jax.random.normal(ks[3], (hidden,), jnp.float32)
    w_gamma = 0.1 * jax.random.normal(ks[4], (C_in, hidden, 3, 3), jnp.float32)
    b_gamma = 0.1 * jax.random.normal(ks[5], (C_in,), jnp.float32)
    w_beta = 0.1 * jax.random.normal(ks[6], (C_in, hidden, 3, 3), jnp.float32)
    b_beta = 0.1 * jax.random.normal(ks[7], (C_in,), jnp.float32)

    args = (x_nchw, seg_nchw, w_sh, b_sh, w_gamma, b_gamma, w_beta, b_beta)

    # 1) f32-MXU path: strict numeric check against the HIGHEST-precision reference.
    out_f32 = jax.block_until_ready(spade_forward(*args, mxu_dtype=jnp.float32))
    ref_f32 = jax.block_until_ready(_reference_nchw(*args, conv_dtype=jnp.float32))
    np.testing.assert_allclose(np.asarray(out_f32), np.asarray(ref_f32),
                               rtol=1e-3, atol=1e-3)

    # 2) bf16-MXU path (the performance default): compared against a reference that
    #    also feeds bf16 conv operands with f32 accumulation (per review: bf16
    #    operands cannot meet 1e-3 against a pure-f32 reference at this scale).
    out_bf16 = jax.block_until_ready(spade_forward(*args, mxu_dtype=jnp.bfloat16))
    ref_bf16 = jax.block_until_ready(_reference_nchw(*args, conv_dtype=jnp.bfloat16))
    np.testing.assert_allclose(np.asarray(out_bf16), np.asarray(ref_bf16),
                               rtol=2e-2, atol=2e-2)

    print("KERNEL_OK")
</pallas_src>

<mosaic_0001>
module attributes {stable_mosaic.version = 11 : i64} {
  func.func @kernel(%arg0: i32, %arg1: memref<1x4x256xf32, #tpu.memory_space<vmem>>, %arg2: memref<1x27x256xf32, #tpu.memory_space<vmem>>, %arg3: memref<32x27xf32, #tpu.memory_space<vmem>>, %arg4: memref<32x1xf32, #tpu.memory_space<vmem>>, %arg5: memref<9x8x32xf32, #tpu.memory_space<vmem>>, %arg6: memref<8x1xf32, #tpu.memory_space<vmem>>, %arg7: memref<1x4x256xf32, #tpu.memory_space<vmem>>) attributes {dimension_semantics = [#tpu.dimension_semantics<parallel>], iteration_bounds = array<i64: 2>, scalar_prefetch = 0 : i64, scratch_operands = 0 : i64, tpu.core_type = #tpu.core_type<tc>, window_params = [{transform_indices = @transform_0, window_bounds = array<i64: 1, 4, 256>}, {transform_indices = @transform_1, window_bounds = array<i64: 1, 27, 256>}, {pipeline_mode = #tpu.pipeline_mode<synchronous>, transform_indices = @transform_2, window_bounds = array<i64: 32, 27>}, {pipeline_mode = #tpu.pipeline_mode<synchronous>, transform_indices = @transform_3, window_bounds = array<i64: 32, 1>}, {pipeline_mode = #tpu.pipeline_mode<synchronous>, transform_indices = @transform_4, window_bounds = array<i64: 9, 8, 32>}, {pipeline_mode = #tpu.pipeline_mode<synchronous>, transform_indices = @transform_5, window_bounds = array<i64: 8, 1>}, {transform_indices = @transform_6, window_bounds = array<i64: 1, 4, 256>}]} {
    %c0 = arith.constant 0 : index
    %c0_0 = arith.constant 0 : index
    %c0_1 = arith.constant 0 : index
    %0 = vector.load %arg1[%c0, %c0_0, %c0_1] : memref<1x4x256xf32, #tpu.memory_space<vmem>>, vector<1x4x256xf32>
    %1 = vector.shape_cast %0 : vector<1x4x256xf32> to vector<4x256xf32>
    %cst = arith.constant dense<0.000000e+00> : vector<4xf32>
    %2 = vector.multi_reduction <add>, %1, %cst [1] : vector<4x256xf32> to vector<4xf32>
    %3 = vector.shape_cast %2 : vector<4xf32> to vector<4x1xf32>
    %cst_2 = arith.constant 2.560000e+02 : f32
    %4 = vector.broadcast %cst_2 : f32 to vector<4x1xf32>
    %5 = arith.divf %3, %4 : vector<4x1xf32>
    %6 = vector.broadcast %5 : vector<4x1xf32> to vector<4x256xf32>
    %7 = arith.subf %1, %6 : vector<4x256xf32>
    %8 = arith.mulf %7, %7 : vector<4x256xf32>
    %cst_3 = arith.constant dense<0.000000e+00> : vector<4xf32>
    %9 = vector.multi_reduction <add>, %8, %cst_3 [1] : vector<4x256xf32> to vector<4xf32>
    %10 = vector.shape_cast %9 : vector<4xf32> to vector<4x1xf32>
    %cst_4 = arith.constant 2.560000e+02 : f32
    %11 = vector.broadcast %cst_4 : f32 to vector<4x1xf32>
    %12 = arith.divf %10, %11 : vector<4x1xf32>
    %cst_5 = arith.constant 9.99999974E-6 : f32
    %13 = vector.broadcast %cst_5 : f32 to vector<4x1xf32>
    %14 = arith.addf %12, %13 : vector<4x1xf32>
    %15 = math.rsqrt %14 : vector<4x1xf32>
    %16 = vector.broadcast %15 : vector<4x1xf32> to vector<4x256xf32>
    %17 = arith.mulf %7, %16 : vector<4x256xf32>
    %c0_6 = arith.constant 0 : index
    %c0_7 = arith.constant 0 : index
    %18 = vector.load %arg3[%c0_6, %c0_7] : memref<32x27xf32, #tpu.memory_space<vmem>>, vector<32x27xf32>
    %c0_8 = arith.constant 0 : index
    %c0_9 = arith.constant 0 : index
    %c0_10 = arith.constant 0 : index
    %19 = vector.load %arg2[%c0_8, %c0_9, %c0_10] : memref<1x27x256xf32, #tpu.memory_space<vmem>>, vector<1x27x256xf32>
    %20 = vector.shape_cast %19 : vector<1x27x256xf32> to vector<27x256xf32>
    %cst_11 = arith.constant dense<0.000000e+00> : vector<32x256xf32>
    %21 = tpu.matmul %18, %20, %cst_11 {dimension_numbers = #tpu.dot_dimension_numbers<[1], [0], [0], [1], [0, 0, 1, 1], [], []>} : vector<32x27xf32>, vector<27x256xf32>, vector<32x256xf32> -> vector<32x256xf32>
    %c0_12 = arith.constant 0 : index
    %c0_13 = arith.constant 0 : index
    %22 = vector.load %arg4[%c0_12, %c0_13] : memref<32x1xf32, #tpu.memory_space<vmem>>, vector<32x1xf32>
    %23 = vector.broadcast %22 : vector<32x1xf32> to vector<32x256xf32>
    %24 = arith.addf %21, %23 : vector<32x256xf32>
    %cst_14 = arith.constant 0.000000e+00 : f32
    %25 = vector.broadcast %cst_14 : f32 to vector<32x256xf32>
    %26 = arith.maximumf %24, %25 : vector<32x256xf32>
    %cst_15 = arith.constant 0.000000e+00 : f32
    %27 = vector.broadcast %cst_15 : f32 to vector<32x128xf32>
    %28 = tpu.concatenate %27, %26, %27 in 1 : vector<32x128xf32>, vector<32x256xf32>, vector<32x128xf32> -> vector<32x512xf32>
    %29 = tpu.iota {dimensions = array<i32: 1>} : vector<1x256xi32>
    %c15_i32 = arith.constant 15 : i32
    %30 = vector.broadcast %c15_i32 : i32 to vector<1x256xi32>
    %31 = arith.andi %29, %30 : vector<1x256xi32>
    %c16_i32 = arith.constant 16 : i32
    %32 = vector.broadcast %c16_i32 : i32 to vector<1x256xi32>
    %33 = arith.cmpi sge, %29, %32 : vector<1x256xi32>
    %c240_i32 = arith.constant 240 : i32
    %34 = vector.broadcast %c240_i32 : i32 to vector<1x256xi32>
    %35 = arith.cmpi slt, %29, %34 : vector<1x256xi32>
    %c1_i32 = arith.constant 1 : i32
    %36 = vector.broadcast %c1_i32 : i32 to vector<1x256xi32>
    %37 = arith.cmpi sge, %31, %36 : vector<1x256xi32>
    %c14_i32 = arith.constant 14 : i32
    %38 = vector.broadcast %c14_i32 : i32 to vector<1x256xi32>
    %39 = arith.cmpi sle, %31, %38 : vector<1x256xi32>
    %cst_16 = arith.constant 0.000000e+00 : f32
    %40 = vector.broadcast %cst_16 : f32 to vector<8x256xf32>
    %41 = vector.extract_strided_slice %28 {offsets = [0, 111], sizes = [32, 256], strides = [1, 1]} : vector<32x512xf32> to vector<32x256xf32>
    %42 = arith.andi %33, %37 : vector<1x256xi1>
    %cst_17 = arith.constant 0.000000e+00 : f32
    %43 = vector.broadcast %cst_17 : f32 to vector<32x256xf32>
    %44 = vector.shape_cast %42 : vector<1x256xi1> to vector<1x256xi1>
    %45 = vector.broadcast %44 : vector<1x256xi1> to vector<32x256xi1>
    %46 = arith.select %45, %41, %43 : vector<32x256xi1>, vector<32x256xf32>
    %c0_18 = arith.constant 0 : index
    %c0_19 = arith.constant 0 : index
    %c0_20 = arith.constant 0 : index
    %47 = vector.load %arg5[%c0_18, %c0_19, %c0_20] : memref<9x8x32xf32, #tpu.memory_space<vmem>>, vector<1x8x32xf32>
    %48 = vector.shape_cast %47 : vector<1x8x32xf32> to vector<8x32xf32>
    %cst_21 = arith.constant dense<0.000000e+00> : vector<8x256xf32>
    %49 = tpu.matmul %48, %46, %cst_21 {dimension_numbers = #tpu.dot_dimension_numbers<[1], [0], [0], [1], [0, 0, 1, 1], [], []>} : vector<8x32xf32>, vector<32x256xf32>, vector<8x256xf32> -> vector<8x256xf32>
    %50 = arith.addf %40, %49 : vector<8x256xf32>
    %51 = vector.extract_strided_slice %28 {offsets = [0, 112], sizes = [32, 256], strides = [1, 1]} : vector<32x512xf32> to vector<32x256xf32>
    %cst_22 = arith.constant 0.000000e+00 : f32
    %52 = vector.broadcast %cst_22 : f32 to vector<32x256xf32>
    %53 = vector.shape_cast %33 : vector<1x256xi1> to vector<1x256xi1>
    %54 = vector.broadcast %53 : vector<1x256xi1> to vector<32x256xi1>
    %55 = arith.select %54, %51, %52 : vector<32x256xi1>, vector<32x256xf32>
    %c1 = arith.constant 1 : index
    %c0_23 = arith.constant 0 : index
    %c0_24 = arith.constant 0 : index
    %56 = vector.load %arg5[%c1, %c0_23, %c0_24] : memref<9x8x32xf32, #tpu.memory_space<vmem>>, vector<1x8x32xf32>
    %57 = vector.shape_cast %56 : vector<1x8x32xf32> to vector<8x32xf32>
    %cst_25 = arith.constant dense<0.000000e+00> : vector<8x256xf32>
    %58 = tpu.matmul %57, %55, %cst_25 {dimension_numbers = #tpu.dot_dimension_numbers<[1], [0], [0], [1], [0, 0, 1, 1], [], []>} : vector<8x32xf32>, vector<32x256xf32>, vector<8x256xf32> -> vector<8x256xf32>
    %59 = arith.addf %50, %58 : vector<8x256xf32>
    %60 = vector.extract_strided_slice %28 {offsets = [0, 113], sizes = [32, 256], strides = [1, 1]} : vector<32x512xf32> to vector<32x256xf32>
    %61 = arith.andi %33, %39 : vector<1x256xi1>
    %cst_26 = arith.constant 0.000000e+00 : f32
    %62 = vector.broadcast %cst_26 : f32 to vector<32x256xf32>
    %63 = vector.shape_cast %61 : vector<1x256xi1> to vector<1x256xi1>
    %64 = vector.broadcast %63 : vector<1x256xi1> to vector<32x256xi1>
    %65 = arith.select %64, %60, %62 : vector<32x256xi1>, vector<32x256xf32>
    %c2 = arith.constant 2 : index
    %c0_27 = arith.constant 0 : index
    %c0_28 = arith.constant 0 : index
    %66 = vector.load %arg5[%c2, %c0_27, %c0_28] : memref<9x8x32xf32, #tpu.memory_space<vmem>>, vector<1x8x32xf32>
    %67 = vector.shape_cast %66 : vector<1x8x32xf32> to vector<8x32xf32>
    %cst_29 = arith.constant dense<0.000000e+00> : vector<8x256xf32>
    %68 = tpu.matmul %67, %65, %cst_29 {dimension_numbers = #tpu.dot_dimension_numbers<[1], [0], [0], [1], [0, 0, 1, 1], [], []>} : vector<8x32xf32>, vector<32x256xf32>, vector<8x256xf32> -> vector<8x256xf32>
    %69 = arith.addf %59, %68 : vector<8x256xf32>
    %70 = vector.extract_strided_slice %28 {offsets = [0, 127], sizes = [32, 256], strides = [1, 1]} : vector<32x512xf32> to vector<32x256xf32>
    %cst_30 = arith.constant 0.000000e+00 : f32
    %71 = vector.broadcast %cst_30 : f32 to vector<32x256xf32>
    %72 = vector.shape_cast %37 : vector<1x256xi1> to vector<1x256xi1>
    %73 = vector.broadcast %72 : vector<1x256xi1> to vector<32x256xi1>
    %74 = arith.select %73, %70, %71 : vector<32x256xi1>, vector<32x256xf32>
    %c3 = arith.constant 3 : index
    %c0_31 = arith.constant 0 : index
    %c0_32 = arith.constant 0 : index
    %75 = vector.load %arg5[%c3, %c0_31, %c0_32] : memref<9x8x32xf32, #tpu.memory_space<vmem>>, vector<1x8x32xf32>
    %76 = vector.shape_cast %75 : vector<1x8x32xf32> to vector<8x32xf32>
    %cst_33 = arith.constant dense<0.000000e+00> : vector<8x256xf32>
    %77 = tpu.matmul %76, %74, %cst_33 {dimension_numbers = #tpu.dot_dimension_numbers<[1], [0], [0], [1], [0, 0, 1, 1], [], []>} : vector<8x32xf32>, vector<32x256xf32>, vector<8x256xf32> -> vector<8x256xf32>
    %78 = arith.addf %69, %77 : vector<8x256xf32>
    %79 = vector.extract_strided_slice %28 {offsets = [0, 128], sizes = [32, 256], strides = [1, 1]} : vector<32x512xf32> to vector<32x256xf32>
    %c4 = arith.constant 4 : index
    %c0_34 = arith.constant 0 : index
    %c0_35 = arith.constant 0 : index
    %80 = vector.load %arg5[%c4, %c0_34, %c0_35] : memref<9x8x32xf32, #tpu.memory_space<vmem>>, vector<1x8x32xf32>
    %81 = vector.shape_cast %80 : vector<1x8x32xf32> to vector<8x32xf32>
    %cst_36 = arith.constant dense<0.000000e+00> : vector<8x256xf32>
    %82 = tpu.matmul %81, %79, %cst_36 {dimension_numbers = #tpu.dot_dimension_numbers<[1], [0], [0], [1], [0, 0, 1, 1], [], []>} : vector<8x32xf32>, vector<32x256xf32>, vector<8x256xf32> -> vector<8x256xf32>
    %83 = arith.addf %78, %82 : vector<8x256xf32>
    %84 = vector.extract_strided_slice %28 {offsets = [0, 129], sizes = [32, 256], strides = [1, 1]} : vector<32x512xf32> to vector<32x256xf32>
    %cst_37 = arith.constant 0.000000e+00 : f32
    %85 = vector.broadcast %cst_37 : f32 to vector<32x256xf32>
    %86 = vector.shape_cast %39 : vector<1x256xi1> to vector<1x256xi1>
    %87 = vector.broadcast %86 : vector<1x256xi1> to vector<32x256xi1>
    %88 = arith.select %87, %84, %85 : vector<32x256xi1>, vector<32x256xf32>
    %c5 = arith.constant 5 : index
    %c0_38 = arith.constant 0 : index
    %c0_39 = arith.constant 0 : index
    %89 = vector.load %arg5[%c5, %c0_38, %c0_39] : memref<9x8x32xf32, #tpu.memory_space<vmem>>, vector<1x8x32xf32>
    %90 = vector.shape_cast %89 : vector<1x8x32xf32> to vector<8x32xf32>
    %cst_40 = arith.constant dense<0.000000e+00> : vector<8x256xf32>
    %91 = tpu.matmul %90, %88, %cst_40 {dimension_numbers = #tpu.dot_dimension_numbers<[1], [0], [0], [1], [0, 0, 1, 1], [], []>} : vector<8x32xf32>, vector<32x256xf32>, vector<8x256xf32> -> vector<8x256xf32>
    %92 = arith.addf %83, %91 : vector<8x256xf32>
    %93 = vector.extract_strided_slice %28 {offsets = [0, 143], sizes = [32, 256], strides = [1, 1]} : vector<32x512xf32> to vector<32x256xf32>
    %94 = arith.andi %35, %37 : vector<1x256xi1>
    %cst_41 = arith.constant 0.000000e+00 : f32
    %95 = vector.broadcast %cst_41 : f32 to vector<32x256xf32>
    %96 = vector.shape_cast %94 : vector<1x256xi1> to vector<1x256xi1>
    %97 = vector.broadcast %96 : vector<1x256xi1> to vector<32x256xi1>
    %98 = arith.select %97, %93, %95 : vector<32x256xi1>, vector<32x256xf32>
    %c6 = arith.constant 6 : index
    %c0_42 = arith.constant 0 : index
    %c0_43 = arith.constant 0 : index
    %99 = vector.load %arg5[%c6, %c0_42, %c0_43] : memref<9x8x32xf32, #tpu.memory_space<vmem>>, vector<1x8x32xf32>
    %100 = vector.shape_cast %99 : vector<1x8x32xf32> to vector<8x32xf32>
    %cst_44 = arith.constant dense<0.000000e+00> : vector<8x256xf32>
    %101 = tpu.matmul %100, %98, %cst_44 {dimension_numbers = #tpu.dot_dimension_numbers<[1], [0], [0], [1], [0, 0, 1, 1], [], []>} : vector<8x32xf32>, vector<32x256xf32>, vector<8x256xf32> -> vector<8x256xf32>
    %102 = arith.addf %92, %101 : vector<8x256xf32>
    %103 = vector.extract_strided_slice %28 {offsets = [0, 144], sizes = [32, 256], strides = [1, 1]} : vector<32x512xf32> to vector<32x256xf32>
    %cst_45 = arith.constant 0.000000e+00 : f32
    %104 = vector.broadcast %cst_45 : f32 to vector<32x256xf32>
    %105 = vector.shape_cast %35 : vector<1x256xi1> to vector<1x256xi1>
    %106 = vector.broadcast %105 : vector<1x256xi1> to vector<32x256xi1>
    %107 = arith.select %106, %103, %104 : vector<32x256xi1>, vector<32x256xf32>
    %c7 = arith.constant 7 : index
    %c0_46 = arith.constant 0 : index
    %c0_47 = arith.constant 0 : index
    %108 = vector.load %arg5[%c7, %c0_46, %c0_47] : memref<9x8x32xf32, #tpu.memory_space<vmem>>, vector<1x8x32xf32>
    %109 = vector.shape_cast %108 : vector<1x8x32xf32> to vector<8x32xf32>
    %cst_48 = arith.constant dense<0.000000e+00> : vector<8x256xf32>
    %110 = tpu.matmul %109, %107, %cst_48 {dimension_numbers = #tpu.dot_dimension_numbers<[1], [0], [0], [1], [0, 0, 1, 1], [], []>} : vector<8x32xf32>, vector<32x256xf32>, vector<8x256xf32> -> vector<8x256xf32>
    %111 = arith.addf %102, %110 : vector<8x256xf32>
    %112 = vector.extract_strided_slice %28 {offsets = [0, 145], sizes = [32, 256], strides = [1, 1]} : vector<32x512xf32> to vector<32x256xf32>
    %113 = arith.andi %35, %39 : vector<1x256xi1>
    %cst_49 = arith.constant 0.000000e+00 : f32
    %114 = vector.broadcast %cst_49 : f32 to vector<32x256xf32>
    %115 = vector.shape_cast %113 : vector<1x256xi1> to vector<1x256xi1>
    %116 = vector.broadcast %115 : vector<1x256xi1> to vector<32x256xi1>
    %117 = arith.select %116, %112, %114 : vector<32x256xi1>, vector<32x256xf32>
    %c8 = arith.constant 8 : index
    %c0_50 = arith.constant 0 : index
    %c0_51 = arith.constant 0 : index
    %118 = vector.load %arg5[%c8, %c0_50, %c0_51] : memref<9x8x32xf32, #tpu.memory_space<vmem>>, vector<1x8x32xf32>
    %119 = vector.shape_cast %118 : vector<1x8x32xf32> to vector<8x32xf32>
    %cst_52 = arith.constant dense<0.000000e+00> : vector<8x256xf32>
    %120 = tpu.matmul %119, %117, %cst_52 {dimension_numbers = #tpu.dot_dimension_numbers<[1], [0], [0], [1], [0, 0, 1, 1], [], []>} : vector<8x32xf32>, vector<32x256xf32>, vector<8x256xf32> -> vector<8x256xf32>
    %121 = arith.addf %111, %120 : vector<8x256xf32>
    %c0_53 = arith.constant 0 : index
    %c0_54 = arith.constant 0 : index
    %122 = vector.load %arg6[%c0_53, %c0_54] : memref<8x1xf32, #tpu.memory_space<vmem>>, vector<8x1xf32>
    %123 = vector.broadcast %122 : vector<8x1xf32> to vector<8x256xf32>
    %124 = arith.addf %121, %123 : vector<8x256xf32>
    %125 = vector.extract_strided_slice %124 {offsets = [0, 0], sizes = [4, 256], strides = [1, 1]} : vector<8x256xf32> to vector<4x256xf32>
    %126 = vector.extract_strided_slice %124 {offsets = [4, 0], sizes = [4, 256], strides = [1, 1]} : vector<8x256xf32> to vector<4x256xf32>
    %127 = arith.mulf %17, %125 : vector<4x256xf32>
    %128 = arith.addf %127, %126 : vector<4x256xf32>
    %c0_55 = arith.constant 0 : index
    %c0_56 = arith.constant 0 : index
    %c0_57 = arith.constant 0 : index
    %129 = vector.load %arg7[%c0_55, %c0_56, %c0_57] : memref<1x4x256xf32, #tpu.memory_space<vmem>>, vector<1x4x256xf32>
    %130 = vector.shape_cast %129 : vector<1x4x256xf32> to vector<4x256xf32>
    %131 = vector.shape_cast %128 : vector<4x256xf32> to vector<1x4x256xf32>
    tpu.vector_store %arg7[%c0_55, %c0_56, %c0_57], %131 {strides = array<i32>} : memref<1x4x256xf32, #tpu.memory_space<vmem>>, vector<1x4x256xf32>,
    return
  }
  func.func @transform_0(%arg0: i32) -> (i32, i32, i32) {
    %c0_i32 = arith.constant 0 : i32
    %c0_i32_0 = arith.constant 0 : i32
    %c0_i32_1 = arith.constant 0 : i32
    return %arg0, %c0_i32, %c0_i32_0 : i32, i32, i32
  }
  func.func @transform_1(%arg0: i32) -> (i32, i32, i32) {
    %c0_i32 = arith.constant 0 : i32
    %c0_i32_0 = arith.constant 0 : i32
    %c0_i32_1 = arith.constant 0 : i32
    return %arg0, %c0_i32, %c0_i32_0 : i32, i32, i32
  }
  func.func @transform_2(%arg0: i32) -> (i32, i32) {
    %c0_i32 = arith.constant 0 : i32
    %c0_i32_0 = arith.constant 0 : i32
    %c0_i32_1 = arith.constant 0 : i32
    return %c0_i32, %c0_i32_0 : i32, i32
  }
  func.func @transform_3(%arg0: i32) -> (i32, i32) {
    %c0_i32 = arith.constant 0 : i32
    %c0_i32_0 = arith.constant 0 : i32
    %c0_i32_1 = arith.constant 0 : i32
    return %c0_i32, %c0_i32_0 : i32, i32
  }
  func.func @transform_4(%arg0: i32) -> (i32, i32, i32) {
    %c0_i32 = arith.constant 0 : i32
    %c0_i32_0 = arith.constant 0 : i32
    %c0_i32_1 = arith.constant 0 : i32
    %c0_i32_2 = arith.constant 0 : i32
    return %c0_i32, %c0_i32_0, %c0_i32_1 : i32, i32, i32
  }
  func.func @transform_5(%arg0: i32) -> (i32, i32) {
    %c0_i32 = arith.constant 0 : i32
    %c0_i32_0 = arith.constant 0 : i32
    %c0_i32_1 = arith.constant 0 : i32
    return %c0_i32, %c0_i32_0 : i32, i32
  }
  func.func @transform_6(%arg0: i32) -> (i32, i32, i32) {
    %c0_i32 = arith.constant 0 : i32
    %c0_i32_0 = arith.constant 0 : i32
    %c0_i32_1 = arith.constant 0 : i32
    return %arg0, %c0_i32, %c0_i32_0 : i32, i32, i32
  }
}

</mosaic_0001>

<llo_original>
// kernel: tpu_custom_call.1
$region0: #{tpu_custom_call.1}
  #allocation0 [shape = 'u32[]', space=smem, size = 0x4, offset = 0x4, fixed_abs, tag = 'smem constant byte address 0x4 - core index']
  #allocation1 [shape = 'u32[144,128]{1,0:T(1,128)}', space=vmem, size = 0x12000, scoped, tag = 'internal scratch']
  %s0 = inlined_call_operand.vmem [shape: f32[2,4,256], index: 0, kind: input, shape index: {}]
  %s1 = inlined_call_operand.vmem [shape: f32[2,27,256], index: 1, kind: input, shape index: {}]
  %s2 = inlined_call_operand.vmem [shape: f32[32,27], index: 2, kind: input, shape index: {}]
  %s3 = inlined_call_operand.vmem [shape: f32[32,1], index: 3, kind: input, shape index: {}]
  %s4 = inlined_call_operand.vmem [shape: f32[9,8,32], index: 4, kind: input, shape index: {}]
  %s5 = inlined_call_operand.vmem [shape: f32[8,1], index: 5, kind: input, shape index: {}]
  %s6 = inlined_call_operand.hbm [shape: f32[2,4,256], index: 6, kind: output, shape index: {}]
  %s7 = sld [smem:[#allocation0]]
  $region57: #{tpu_custom_call.1} parent=0
    _
  %s9 = ssub.s32 1, %s7
  %s10 = scalar_select 0, %s9, %s7
  $region1: #{tpu_custom_call.1} parent=0
    #allocation2 [shape = 'u8[8192]{0}', space=vmem, size = 0x2000, scoped, tag = 'output window, operand 0']
    #allocation3 [shape = 's32[2]{0}', space=sflag, size = 0x8, scoped, tag = 'scoped memory for tpu_custom_call.1']
    %11 = vsyncpa [#allocation3], 0
    %s12 = scalar_lea.sflag [#allocation3], 1
    %13 = vsyncpa %s12, 0
    loop: start=0, step=1, limit=4
    $region2: #{tpu_custom_call.1} parent=1 // loop_pre_header
      _
    $region3: #{tpu_custom_call.1} parent=1 // loop_header
      %s15 = sphi 0, %s19
      %p16 = scmp.ge.s32.totalorder %s15, 4
      %s25 = sphi 0, %s27
      %s28 = sphi 0, %s25
      %s29 = sphi 0, %s28
      %s45 = sphi 0, %s29
      %s51 = sphi 0, %s53
      %s54 = sphi 0, %s51
      %s55 = sphi 0, %s54
      %s71 = sphi 0, %s55
      %s75 = sphi 0, %s75
      %s77 = sphi 0, %s75
      %s78 = sphi 0, %s77
      %s92 = sphi 0, %s78
      %s96 = sphi 0, %s96
      %s98 = sphi 0, %s96
      %s99 = sphi 0, %s98
      %s113 = sphi 0, %s99
      %s117 = sphi 0, %s117
      %s119 = sphi 0, %s117
      %s120 = sphi 0, %s119
      %s134 = sphi 0, %s120
      %s138 = sphi 0, %s138
      %s140 = sphi 0, %s138
      %s141 = sphi 0, %s140
      %s155 = sphi 0, %s141
      %s161 = sphi 0, %s163
      %s164 = sphi 0, %s161
      %s165 = sphi 0, %s164
      %s181 = sphi 0, %s165
    $region4: #{tpu_custom_call.1} parent=1 // loop_header_branch
      %18 = sbr.rel (%p16) target = $region8
    $region5: #{tpu_custom_call.1} parent=1 // loop_body
      %s20 = ssub.s32 %s15, 1
      %s21 = ssub.s32 %s15, 2
      %s22 = sadd.s32 %s15, 1
      %s23 = ssub.s32 %s15, %s22
      %p24 = scmp.eq.s32.totalorder %s23, 0
      %s26 = sadd.s32 %s25, 1
      %s27 = scalar_select %p24, %s25, %s26
      %p30 = pneg %p24
      %p31 = scmp.eq.s32.totalorder %s15, 1
      %p32 = por %p30, %p31
      %p33 = scmp.ne.s32.totalorder %s25, %s28
      %p34 = scmp.eq.s32.totalorder %s15, 0
      %p35 = por %p33, %p34
      %p36 = scmp.ne.s32.totalorder %s25, %s28
      %p37 = scmp.eq.s32.totalorder %s20, 1
      %p38 = por %p36, %p37
      %p39 = scmp.ne.s32.totalorder %s28, %s29
      %p40 = scmp.eq.s32.totalorder %s20, 0
      %p41 = por %p39, %p40
      %p42 = scmp.ne.s32.totalorder %s28, %s29
      %p43 = scmp.eq.s32.totalorder %s21, 1
      %p44 = por %p42, %p43
      %p46 = scmp.ne.s32.totalorder %s29, %s45
      %p47 = scmp.eq.s32.totalorder %s21, 0
      %p48 = por %p46, %p47
      %s49 = ssub.s32 %s15, %s22
      %p50 = scmp.eq.s32.totalorder %s49, 0
      %s52 = sadd.s32 %s51, 1
      %s53 = scalar_select %p50, %s51, %s52
      %p56 = pneg %p50
      %p57 = scmp.eq.s32.totalorder %s15, 1
      %p58 = por %p56, %p57
      %p59 = scmp.ne.s32.totalorder %s51, %s54
      %p60 = scmp.eq.s32.totalorder %s15, 0
      %p61 = por %p59, %p60
      %p62 = scmp.ne.s32.totalorder %s51, %s54
      %p63 = scmp.eq.s32.totalorder %s20, 1
      %p64 = por %p62, %p63
      %p65 = scmp.ne.s32.totalorder %s54, %s55
      %p66 = scmp.eq.s32.totalorder %s20, 0
      %p67 = por %p65, %p66
      %p68 = scmp.ne.s32.totalorder %s54, %s55
      %p69 = scmp.eq.s32.totalorder %s21, 1
      %p70 = por %p68, %p69
      %p72 = scmp.ne.s32.totalorder %s55, %s71
      %p73 = scmp.eq.s32.totalorder %s21, 0
      %p74 = por %p72, %p73
      %s76 = sadd.s32 %s75, 1
      %p79 = scmp.eq.s32.totalorder %s15, 1
      %p80 = scmp.ne.s32.totalorder %s75, %s77
      %p81 = scmp.eq.s32.totalorder %s15, 0
      %p82 = por %p80, %p81
      %p83 = scmp.ne.s32.totalorder %s75, %s77
      %p84 = scmp.eq.s32.totalorder %s20, 1
      %p85 = por %p83, %p84
      %p86 = scmp.ne.s32.totalorder %s77, %s78
      %p87 = scmp.eq.s32.totalorder %s20, 0
      %p88 = por %p86, %p87
      %p89 = scmp.ne.s32.totalorder %s77, %s78
      %p90 = scmp.eq.s32.totalorder %s21, 1
      %p91 = por %p89, %p90
      %p93 = scmp.ne.s32.totalorder %s78, %s92
      %p94 = scmp.eq.s32.totalorder %s21, 0
      %p95 = por %p93, %p94
      %s97 = sadd.s32 %s96, 1
      %p100 = scmp.eq.s32.totalorder %s15, 1
      %p101 = scmp.ne.s32.totalorder %s96, %s98
      %p102 = scmp.eq.s32.totalorder %s15, 0
      %p103 = por %p101, %p102
      %p104 = scmp.ne.s32.totalorder %s96, %s98
      %p105 = scmp.eq.s32.totalorder %s20, 1
      %p106 = por %p104, %p105
      %p107 = scmp.ne.s32.totalorder %s98, %s99
      %p108 = scmp.eq.s32.totalorder %s20, 0
      %p109 = por %p107, %p108
      %p110 = scmp.ne.s32.totalorder %s98, %s99
      %p111 = scmp.eq.s32.totalorder %s21, 1
      %p112 = por %p110, %p111
      %p114 = scmp.ne.s32.totalorder %s99, %s113
      %p115 = scmp.eq.s32.totalorder %s21, 0
      %p116 = por %p114, %p115
      %s118 = sadd.s32 %s117, 1
      %p121 = scmp.eq.s32.totalorder %s15, 1
      %p122 = scmp.ne.s32.totalorder %s117, %s119
      %p123 = scmp.eq.s32.totalorder %s15, 0
      %p124 = por %p122, %p123
      %p125 = scmp.ne.s32.totalorder %s117, %s119
      %p126 = scmp.eq.s32.totalorder %s20, 1
      %p127 = por %p125, %p126
      %p128 = scmp.ne.s32.totalorder %s119, %s120
      %p129 = scmp.eq.s32.totalorder %s20, 0
      %p130 = por %p128, %p129
      %p131 = scmp.ne.s32.totalorder %s119, %s120
      %p132 = scmp.eq.s32.totalorder %s21, 1
      %p133 = por %p131, %p132
      %p135 = scmp.ne.s32.totalorder %s120, %s134
      %p136 = scmp.eq.s32.totalorder %s21, 0
      %p137 = por %p135, %p136
      %s139 = sadd.s32 %s138, 1
      %p142 = scmp.eq.s32.totalorder %s15, 1
      %p143 = scmp.ne.s32.totalorder %s138, %s140
      %p144 = scmp.eq.s32.totalorder %s15, 0
      %p145 = por %p143, %p144
      %p146 = scmp.ne.s32.totalorder %s138, %s140
      %p147 = scmp.eq.s32.totalorder %s20, 1
      %p148 = por %p146, %p147
      %p149 = scmp.ne.s32.totalorder %s140, %s141
      %p150 = scmp.eq.s32.totalorder %s20, 0
      %p151 = por %p149, %p150
      %p152 = scmp.ne.s32.totalorder %s140, %s141
      %p153 = scmp.eq.s32.totalorder %s21, 1
      %p154 = por %p152, %p153
      %p156 = scmp.ne.s32.totalorder %s141, %s155
      %p157 = scmp.eq.s32.totalorder %s21, 0
      %p158 = por %p156, %p157
      %s159 = ssub.s32 %s15, %s22
      %p160 = scmp.eq.s32.totalorder %s159, 0
      %s162 = sadd.s32 %s161, 1
      %s163 = scalar_select %p160, %s161, %s162
      %p166 = pneg %p160
      %p167 = scmp.eq.s32.totalorder %s15, 1
      %p168 = por %p166, %p167
      %p169 = scmp.ne.s32.totalorder %s161, %s164
      %p170 = scmp.eq.s32.totalorder %s15, 0
      %p171 = por %p169, %p170
      %p172 = scmp.ne.s32.totalorder %s161, %s164
      %p173 = scmp.eq.s32.totalorder %s20, 1
      %p174 = por %p172, %p173
      %p175 = scmp.ne.s32.totalorder %s164, %s165
      %p176 = scmp.eq.s32.totalorder %s20, 0
      %p177 = por %p175, %p176
      %p178 = scmp.ne.s32.totalorder %s164, %s165
      %p179 = scmp.eq.s32.totalorder %s21, 1
      %p180 = por %p178, %p179
      %p182 = scmp.ne.s32.totalorder %s165, %s181
      %p183 = scmp.eq.s32.totalorder %s21, 0
      %p184 = por %p182, %p183
      %p185 = scmp.le.s32.totalorder 1, %s15
      %p186 = scmp.lt.s32.totalorder %s15, 3
      %p187 = pnand %p185, %p186
      %p188 = pneg %p187
      // Predicated region
      $region9: #{tpu_custom_call.1} parent=5 // pred_check
        _
      $region10: #{tpu_custom_call.1} parent=5 // pred_check_branch
        %190 = sbr.rel (%p187) target = $region12
      $region11: #{tpu_custom_call.1} parent=5 // pred_region
        %s191 = ssub.s32 %s15, 1
        // Predicated region
        $region13: #{tpu_custom_call.1} parent=11 // pred_check
          %p192 = pneg %p88
        $region14: #{tpu_custom_call.1} parent=11 // pred_check_branch
          %194 = sbr.rel (%p192) target = $region16
        $region15: #{tpu_custom_call.1} parent=11 // pred_region
          _
        $region16: #{tpu_custom_call.1} parent=11 // pred_fallthru
          _
        // Predicated region
        $region17: #{tpu_custom_call.1} parent=11 // pred_check
          %p195 = pneg %p109
        $region18: #{tpu_custom_call.1} parent=11 // pred_check_branch
          %197 = sbr.rel (%p195) target = $region20
        $region19: #{tpu_custom_call.1} parent=11 // pred_region
          _
        $region20: #{tpu_custom_call.1} parent=11 // pred_fallthru
          _
        // Predicated region
        $region21: #{tpu_custom_call.1} parent=11 // pred_check
          %p198 = pneg %p130
        $region22: #{tpu_custom_call.1} parent=11 // pred_check_branch
          %200 = sbr.rel (%p198) target = $region24
        $region23: #{tpu_custom_call.1} parent=11 // pred_region
          _
        $region24: #{tpu_custom_call.1} parent=11 // pred_fallthru
          _
        // Predicated region
        $region25: #{tpu_custom_call.1} parent=11 // pred_check
          %p201 = pneg %p151
        $region26: #{tpu_custom_call.1} parent=11 // pred_check_branch
          %203 = sbr.rel (%p201) target = $region28
        $region27: #{tpu_custom_call.1} parent=11 // pred_region
          _
        $region28: #{tpu_custom_call.1} parent=11 // pred_fallthru
          _
      $region12: #{tpu_custom_call.1} parent=5 // pred_fallthru
        _
      %p204 = scmp.lt.s32.totalorder %s15, 2
      // Predicated region
      $region29: #{tpu_custom_call.1} parent=5 // pred_check
        %p205 = pneg %p204
      $region30: #{tpu_custom_call.1} parent=5 // pred_check_branch
        %207 = sbr.rel (%p205) target = $region32
      $region31: #{tpu_custom_call.1} parent=5 // pred_region
        // Predicated region
        $region33: #{tpu_custom_call.1} parent=31 // pred_check
          %p208 = pneg %p35
        $region34: #{tpu_custom_call.1} parent=31 // pred_check_branch
          %210 = sbr.rel (%p208) target = $region36
        $region35: #{tpu_custom_call.1} parent=31 // pred_region
          %p211 = scmp.lt.s32.totalorder %s15, 1
          %s212 = scalar_select %p211, %s15, 1
          %s213 = smul.addr %s212, 2
          %s214 = smul.addr %s213, 4
          %s215 = scalar_lea.vmem %s0, %s214
        $region36: #{tpu_custom_call.1} parent=31 // pred_fallthru
          _
        // Predicated region
        $region37: #{tpu_custom_call.1} parent=31 // pred_check
          %p216 = pneg %p61
        $region38: #{tpu_custom_call.1} parent=31 // pred_check_branch
          %218 = sbr.rel (%p216) target = $region40
        $region39: #{tpu_custom_call.1} parent=31 // pred_region
          %p219 = scmp.lt.s32.totalorder %s15, 1
          %s220 = scalar_select %p219, %s15, 1
          %s221 = smul.addr %s220, 8
          %s222 = smul.addr %s221, 8
          %s223 = scalar_lea.vmem %s1, %s222
        $region40: #{tpu_custom_call.1} parent=31 // pred_fallthru
          _
      $region32: #{tpu_custom_call.1} parent=5 // pred_fallthru
        _
      %p224 = scmp.le.s32.totalorder 1, %s15
      %p225 = scmp.lt.s32.totalorder %s15, 3
      %p226 = pnand %p224, %p225
      %p227 = pneg %p226
      // Predicated region
      $region41: #{tpu_custom_call.1} parent=5 // pred_check
        _
      $region42: #{tpu_custom_call.1} parent=5 // pred_check_branch
        %229 = sbr.rel (%p226) target = $region44
      $region43: #{tpu_custom_call.1} parent=5 // pred_region
        %s230 = ssub.s32 %s15, 1
        %p231 = scmp.lt.s32.totalorder %s20, 1
        %s232 = scalar_select %p231, %s20, 1
        %s233 = smul.addr %s232, 2
        %s234 = smul.addr %s233, 4
        %s235 = scalar_lea.vmem %s0, %s234
        %p236 = pneg %p41
        %p237 = pneg %p38
        %p238 = scmp.lt.s32.totalorder %s20, 1
        %s239 = scalar_select %p238, %s20, 1
        %s240 = smul.addr %s239, 8
        %s241 = smul.addr %s240, 8
        %s242 = scalar_lea.vmem %s1, %s241
        %p243 = pneg %p67
        %p244 = pneg %p64
        %p245 = pneg %p88
        %p246 = pneg %p85
        %p247 = pneg %p109
        %p248 = pneg %p106
        %p249 = pneg %p130
        %p250 = pneg %p127
        %p251 = pneg %p151
        %p252 = pneg %p148
        %p253 = pneg %p177
        %p254 = pneg %p174
        %s255 = sand.u32 %s164, 1
        %s256 = scalar_lea.sflag [#allocation3], %s255
        %s257 = sand.u32 %s164, 1
        %s258 = smul.addr %s257, 8
        %s259 = scalar_lea.vmem [#allocation2], %s258
        %p260 = scmp.lt.s32.totalorder %s20, 1
        %s261 = scalar_select %p260, %s20, 1
        %s262 = smul.addr %s261, 2
        %s263 = smul.addr %s262, 4
        %s264 = scalar_lea.vmem %s0, %s263
        %p265 = scmp.lt.s32.totalorder %s20, 1
        %s266 = scalar_select %p265, %s20, 1
        %s267 = smul.addr %s266, 8
        %s268 = smul.addr %s267, 8
        %s269 = scalar_lea.vmem %s1, %s268
        %v270 = vld [vmem:[%s264] sm:$0xff]
        %v272 = vcombine.high %v270, %v270
        %vm274 = vcmask 1043456
        %v275 = vsel %vm274, %v270, 0.0
        %v276 = vsel %vm274, %v272, 0.0
        %v277 = vadd.f32 %v275, %v276
        %278 = vadd.xlane.f32.xlu0 %v277
        %v279 = vpop.xlane.xlu0 %278
        %v280 = vrcp.pop 256.0
        %v281 = vmul.f32 %v279, %v280
        %v284 = vunpack.c.l.s4 839922192
        %v285 = vunpack.c.0.s8 %v284
        %v286 = vlaneseq
        %v287 = vshrl.u32 %v286, 7
        %v288 = vsub.s32 %v285, %v287
        %v289 = vrot.slane %v281, %v288
        %v291 = vsub.f32 %v270, %v289
        %v292 = vmul.f32 %v291, %v291
        %v294 = vcombine.high %v292, %v292
        %v296 = vsel %vm274, %v292, 0.0
        %v297 = vsel %vm274, %v294, 0.0
        %v298 = vadd.f32 %v296, %v297
        %299 = vadd.xlane.f32.xlu0 %v298
        %v300 = vpop.xlane.xlu0 %299
        %v301 = vmul.f32 %v300, %v280
        %v302 = vadd.f32 %v301, 1e-05
        %v303 = vrsqrt.pop %v302
        %v306 = vunpack.c.l.s4 839922192
        %v307 = vunpack.c.0.s8 %v306
        %v308 = vlaneseq
        %v309 = vshrl.u32 %v308, 7
        %v310 = vsub.s32 %v307, %v309
        %v311 = vrot.slane %v303, %v310
        %v313 = vmul.f32 %v291, %v311
        %v314 = vld [vmem:[%s2] sm:$0xff]
        %v315 = vld [vmem:[%s2 + $0x8] sm:$0xff]
        %v316 = vld [vmem:[%s2 + $0x10] sm:$0xff]
        %v317 = vld [vmem:[%s2 + $0x18] sm:$0xff]
        %v318 = vld [vmem:[%s269] sm:$0xff]
        %v319 = vld [vmem:[%s269 + $0x8] sm:$0xff]
        %v320 = vld [vmem:[%s269 + $0x10] sm:$0xff]
        %v321 = vld [vmem:[%s269 + $0x18] sm:$0xff]
        %v322 = vld [vmem:[%s269 + $0x20] sm:$0xff]
        %v323 = vld [vmem:[%s269 + $0x28] sm:$0xff]
        %v324 = vld [vmem:[%s269 + $0x30] sm:$0x7]
        %v325 = vld [vmem:[%s269 + $0x38] sm:$0x7]
        %v326 = vld [vmem:[%s3] sm:$0xff]
        %v327 = vld [vmem:[%s3 + $0x8] sm:$0xff]
        %v328 = vld [vmem:[%s3 + $0x10] sm:$0xff]
        %v329 = vld [vmem:[%s3 + $0x18] sm:$0xff]
        %331 = vset.pattern.permute.xlu0 0
        %332 = vperm.xlu0 %331, %v326
        %v333 = vpop.permute.xlu0 %332
        %336 = vset.pattern.permute.xlu0 0
        %337 = vperm.xlu0 %336, %v327
        %v338 = vpop.permute.xlu0 %337
        %341 = vset.pattern.permute.xlu0 0
        %342 = vperm.xlu0 %341, %v328
        %v343 = vpop.permute.xlu0 %342
        %346 = vset.pattern.permute.xlu0 0
        %347 = vperm.xlu0 %346, %v329
        %v348 = vpop.permute.xlu0 %347
        %vm350 = vcmask 220160
        %v352 = vsel %vm350, %v314, 0
        %v355 = vsel %vm350, %v315, 0
        %v358 = vsel %vm350, %v316, 0
        %v361 = vsel %vm350, %v317, 0
        %vm363 = vcmask 1042432
        %v365 = vsel %vm363, %v324, 0
        %v368 = vsel %vm363, %v325, 0
        %370 = vmatprep.subr.mxu0 %v319
        %371 = vmatpush1.msra.mxu0 %v318
        %372 = vmatprep.subr.mxu0 %v321
        %373 = vmatpush1.msra.mxu0 %v320
        %374 = vmatprep.subr.mxu0 %v323
        %375 = vmatpush1.msra.mxu0 %v322
        %376 = vmatprep.subr.mxu0 %v368
        %377 = vmatpush1.msra.mxu0 %v365
        %378 = vmatprep.subr.mxu0 0.0
        %379 = vmatpush1.msra.mxu0 0.0
        %380 = vmatprep.subr.mxu0 0.0
        %381 = vmatpush1.msra.mxu0 0.0
        %382 = vmatprep.subr.mxu0 0.0
        %383 = vmatpush1.msra.mxu0 0.0
        %384 = vmatprep.subr.mxu0 0.0
        %385 = vmatpush1.msra.mxu0 0.0
        %386 = vmatprep.subr.mxu0 0.0
        %387 = vmatpush1.msra.mxu0 0.0
        %388 = vmatprep.subr.mxu0 0.0
        %389 = vmatpush1.msra.mxu0 0.0
        %390 = vmatprep.subr.mxu0 0.0
        %391 = vmatpush1.msra.mxu0 0.0
        %392 = vmatprep.subr.mxu0 0.0
        %393 = vmatpush1.msra.mxu0 0.0
        %394 = vmatprep.subr.mxu0 0.0
        %395 = vmatpush1.msra.mxu0 0.0
        %396 = vmatprep.subr.mxu0 0.0
        %397 = vmatpush1.msra.mxu0 0.0
        %398 = vmatprep.subr.mxu0 0.0
        %399 = vmatpush1.msra.mxu0 0.0
        %400 = vmatprep.subr.mxu0 0.0
        %401 = vmatpush1.msra.mxu0 0.0
        %402 = vmatprep.subr.mxu0 0.0
        %403 = vmatpush1.msra.mxu0 0.0
        %404 = vmatprep.subr.mxu0 0.0
        %405 = vmatpush1.msra.mxu0 0.0
        %406 = vmatprep.subr.mxu0 0.0
        %407 = vmatpush1.msra.mxu0 0.0
        %408 = vmatprep.subr.mxu0 0.0
        %409 = vmatpush1.msra.mxu0 0.0
        %410 = vmatprep.subr.mxu0 0.0
        %411 = vmatpush1.msra.mxu0 0.0
        %412 = vmatprep.subr.mxu0 0.0
        %413 = vmatpush1.msra.mxu0 0.0
        %414 = vmatprep.subr.mxu0 0.0
        %415 = vmatpush1.msra.mxu0 0.0
        %416 = vmatprep.subr.mxu0 0.0
        %417 = vmatpush1.msra.mxu0 0.0
        %418 = vmatprep.subr.mxu0 0.0
        %419 = vmatpush1.msra.mxu0 0.0
        %420 = vmatprep.subr.mxu0 0.0
        %421 = vmatpush1.msra.mxu0 0.0
        %422 = vmatprep.subr.mxu0 0.0
        %423 = vmatpush1.msra.mxu0 0.0
        %424 = vmatprep.subr.mxu0 0.0
        %425 = vmatpush1.msra.mxu0 0.0
        %426 = vmatprep.subr.mxu0 0.0
        %427 = vmatpush1.msra.mxu0 0.0
        %428 = vmatprep.subr.mxu0 0.0
        %429 = vmatpush1.msra.mxu0 0.0
        %430 = vmatprep.subr.mxu0 0.0
        %431 = vmatpush1.msra.mxu0 0.0
        %432 = vmatprep.subr.mxu0 0.0
        %433 = vmatpush1.msra.mxu0 0.0
        %434 = vmatprep.mubr.f32.mxu0 0.0
        %435 = vmatmul.mubr.f32.gmra.mrb[0].mxu0 %v352
        %v436 = vpop.f32.mrb[0].mxu0
        %v437 = vadd.f32 %v333, %v436
        %v438 = vpop.f32.mrb[0].mxu0
        %v439 = vadd.f32 %v333, %v438
        %440 = vmatprep.mubr.f32.mxu0 0.0
        %441 = vmatmul.mubr.f32.gmra.mrb[0].mxu0 %v355
        %v442 = vpop.f32.mrb[0].mxu0
        %v443 = vadd.f32 %v338, %v442
        %v444 = vpop.f32.mrb[0].mxu0
        %v445 = vadd.f32 %v338, %v444
        %446 = vmatprep.mubr.f32.mxu0 0.0
        %447 = vmatmul.mubr.f32.gmra.mrb[0].mxu0 %v358
        %v448 = vpop.f32.mrb[0].mxu0
        %v449 = vadd.f32 %v343, %v448
        %v450 = vpop.f32.mrb[0].mxu0
        %v451 = vadd.f32 %v343, %v450
        %452 = vmatprep.mubr.f32.mxu0 0.0
        %453 = vmatmul.mubr.f32.gmra.mrb[0].mxu0 %v361
        %v454 = vpop.f32.mrb[0].mxu0
        %v455 = vadd.f32 %v348, %v454
        %v456 = vpop.f32.mrb[0].mxu0
        %v457 = vadd.f32 %v348, %v456
        %458 = vdwg.mxu0
        %v459 = vmax.f32 %v437, 0.0
        %v460 = vmax.f32 %v439, 0.0
        %v461 = vmax.f32 %v443, 0.0
        %v462 = vmax.f32 %v445, 0.0
        %v463 = vmax.f32 %v449, 0.0
        %v464 = vmax.f32 %v451, 0.0
        %v465 = vmax.f32 %v455, 0.0
        %v466 = vmax.f32 %v457, 0.0
        %v467 = vlaneseq
        %v468 = vand.u32 %v467, 127
        %v469 = vadd.s32 %v468, 128
        %v470 = vand.u32 %v468, 15
        %v471 = vand.u32 %v469, 15
        %vm472 = vcmp.ge.s32.totalorder %v468, 16
        %vm473 = vcmp.ge.s32.totalorder %v469, 16
        %vm474 = vcmp.lt.s32.totalorder %v468, 240
        %vm475 = vcmp.lt.s32.totalorder %v469, 240
        %vm476 = vcmp.ge.s32.totalorder %v470, 1
        %vm477 = vcmp.ge.s32.totalorder %v471, 1
        %vm478 = vcmp.le.s32.totalorder %v470, 14
        %vm479 = vcmp.le.s32.totalorder %v471, 14
        %vm480 = vmand %vm472, %vm476
        %vm481 = vmand %vm473, %vm477
        %v482 = vsel %vm480, 1, 0
        %v483 = vsel %vm481, 1, 0
        %vm484 = vcmp.eq.s32.totalorder %v482, 1
        %vm485 = vcmp.eq.s32.totalorder %v483, 1
        %495 = vrot.lane.b32.xlu0 0.0, 17
        %v496 = vpop.permute.xlu0 %495
        %497 = vrot.lane.b32.xlu0 %v459, 17
        %v498 = vpop.permute.xlu0 %497
        %499 = vrot.lane.b32.xlu0 %v460, 17
        %v500 = vpop.permute.xlu0 %499
        %501 = vrot.lane.b32.xlu0 %v461, 17
        %v502 = vpop.permute.xlu0 %501
        %503 = vrot.lane.b32.xlu0 %v462, 17
        %v504 = vpop.permute.xlu0 %503
        %505 = vrot.lane.b32.xlu0 %v463, 17
        %v506 = vpop.permute.xlu0 %505
        %507 = vrot.lane.b32.xlu0 %v464, 17
        %v508 = vpop.permute.xlu0 %507
        %509 = vrot.lane.b32.xlu0 %v465, 17
        %v510 = vpop.permute.xlu0 %509
        %511 = vrot.lane.b32.xlu0 %v466, 17
        %v512 = vpop.permute.xlu0 %511
        %vm513 = vcmask 138240
        %v514 = vsel %vm513, %v496, %v498
        %v515 = vsel %vm513, %v498, %v500
        %v516 = vsel %vm513, %v496, %v502
        %v517 = vsel %vm513, %v502, %v504
        %v518 = vsel %vm513, %v496, %v506
        %v519 = vsel %vm513, %v506, %v508
        %v520 = vsel %vm513, %v496, %v510
        %v521 = vsel %vm513, %v510, %v512
        %v530 = vsel %vm484, %v514, 0.0
        %v531 = vsel %vm485, %v515, 0.0
        %v532 = vsel %vm484, %v516, 0.0
        %v533 = vsel %vm485, %v517, 0.0
        %v534 = vsel %vm484, %v518, 0.0
        %v535 = vsel %vm485, %v519, 0.0
        %v536 = vsel %vm484, %v520, 0.0
        %v537 = vsel %vm485, %v521, 0.0
        %v538 = vld [vmem:[%s4] sm:$0xff]
        %v539 = vsel %vm472, 1, 0
        %v540 = vsel %vm473, 1, 0
        %vm541 = vcmp.eq.s32.totalorder %v539, 1
        %vm542 = vcmp.eq.s32.totalorder %v540, 1
        %543 = vrot.lane.b32.xlu0 0.0, 16
        %v544 = vpop.permute.xlu0 %543
        %545 = vrot.lane.b32.xlu0 %v459, 16
        %v546 = vpop.permute.xlu0 %545
        %547 = vrot.lane.b32.xlu0 %v460, 16
        %v548 = vpop.permute.xlu0 %547
        %549 = vrot.lane.b32.xlu0 %v461, 16
        %v550 = vpop.permute.xlu0 %549
        %551 = vrot.lane.b32.xlu0 %v462, 16
        %v552 = vpop.permute.xlu0 %551
        %553 = vrot.lane.b32.xlu0 %v463, 16
        %v554 = vpop.permute.xlu0 %553
        %555 = vrot.lane.b32.xlu0 %v464, 16
        %v556 = vpop.permute.xlu0 %555
        %557 = vrot.lane.b32.xlu0 %v465, 16
        %v558 = vpop.permute.xlu0 %557
        %559 = vrot.lane.b32.xlu0 %v466, 16
        %v560 = vpop.permute.xlu0 %559
        %vm561 = vcmask 130048
        %v562 = vsel %vm561, %v544, %v546
        %v563 = vsel %vm561, %v546, %v548
        %v564 = vsel %vm561, %v544, %v550
        %v565 = vsel %vm561, %v550, %v552
        %v566 = vsel %vm561, %v544, %v554
        %v567 = vsel %vm561, %v554, %v556
        %v568 = vsel %vm561, %v544, %v558
        %v569 = vsel %vm561, %v558, %v560
        %v578 = vsel %vm541, %v562, 0.0
        %v579 = vsel %vm542, %v563, 0.0
        %v580 = vsel %vm541, %v564, 0.0
        %v581 = vsel %vm542, %v565, 0.0
        %v582 = vsel %vm541, %v566, 0.0
        %v583 = vsel %vm542, %v567, 0.0
        %v584 = vsel %vm541, %v568, 0.0
        %v585 = vsel %vm542, %v569, 0.0
        %s586 = scalar_lea.vmem %s4, 8
        %v587 = vld [vmem:[%s586] sm:$0xff]
        %vm588 = vcmask 261120
        %v590 = vsel %vm588, %v587, 0
        %592 = vmatprep.subr.mxu0 %v579
        %593 = vmatpush1.msra.mxu0 %v578
        %594 = vmatprep.subr.mxu0 %v581
        %595 = vmatpush1.msra.mxu0 %v580
        %596 = vmatprep.subr.mxu0 %v583
        %597 = vmatpush1.msra.mxu0 %v582
        %598 = vmatprep.subr.mxu0 %v585
        %599 = vmatpush1.msra.mxu0 %v584
        %600 = vmatprep.subr.mxu0 0.0
        %601 = vmatpush1.msra.mxu0 0.0
        %602 = vmatprep.subr.mxu0 0.0
        %603 = vmatpush1.msra.mxu0 0.0
        %604 = vmatprep.subr.mxu0 0.0
        %605 = vmatpush1.msra.mxu0 0.0
        %606 = vmatprep.subr.mxu0 0.0
        %607 = vmatpush1.msra.mxu0 0.0
        %608 = vmatprep.subr.mxu0 0.0
        %609 = vmatpush1.msra.mxu0 0.0
        %610 = vmatprep.subr.mxu0 0.0
        %611 = vmatpush1.msra.mxu0 0.0
        %612 = vmatprep.subr.mxu0 0.0
        %613 = vmatpush1.msra.mxu0 0.0
        %614 = vmatprep.subr.mxu0 0.0
        %615 = vmatpush1.msra.mxu0 0.0
        %616 = vmatprep.subr.mxu0 0.0
        %617 = vmatpush1.msra.mxu0 0.0
        %618 = vmatprep.subr.mxu0 0.0
        %619 = vmatpush1.msra.mxu0 0.0
        %620 = vmatprep.subr.mxu0 0.0
        %621 = vmatpush1.msra.mxu0 0.0
        %622 = vmatprep.subr.mxu0 0.0
        %623 = vmatpush1.msra.mxu0 0.0
        %624 = vmatprep.subr.mxu0 0.0
        %625 = vmatpush1.msra.mxu0 0.0
        %626 = vmatprep.subr.mxu0 0.0
        %627 = vmatpush1.msra.mxu0 0.0
        %628 = vmatprep.subr.mxu0 0.0
        %629 = vmatpush1.msra.mxu0 0.0
        %630 = vmatprep.subr.mxu0 0.0
        %631 = vmatpush1.msra.mxu0 0.0
        %632 = vmatprep.subr.mxu0 0.0
        %633 = vmatpush1.msra.mxu0 0.0
        %634 = vmatprep.subr.mxu0 0.0
        %635 = vmatpush1.msra.mxu0 0.0
        %636 = vmatprep.subr.mxu0 0.0
        %637 = vmatpush1.msra.mxu0 0.0
        %638 = vmatprep.subr.mxu0 0.0
        %639 = vmatpush1.msra.mxu0 0.0
        %640 = vmatprep.subr.mxu0 0.0
        %641 = vmatpush1.msra.mxu0 0.0
        %642 = vmatprep.subr.mxu0 0.0
        %643 = vmatpush1.msra.mxu0 0.0
        %644 = vmatprep.subr.mxu0 0.0
        %645 = vmatpush1.msra.mxu0 0.0
        %646 = vmatprep.subr.mxu0 0.0
        %647 = vmatpush1.msra.mxu0 0.0
        %648 = vmatprep.subr.mxu0 0.0
        %649 = vmatpush1.msra.mxu0 0.0
        %650 = vmatprep.subr.mxu0 0.0
        %651 = vmatpush1.msra.mxu0 0.0
        %652 = vmatprep.subr.mxu0 0.0
        %653 = vmatpush1.msra.mxu0 0.0
        %654 = vmatprep.subr.mxu0 0.0
        %655 = vmatpush1.msra.mxu0 0.0
        %656 = vmatprep.mubr.f32.mxu0 0.0
        %657 = vmatmul.mubr.f32.gmra.mrb[0].mxu0 %v590
        %v658 = vpop.f32.mrb[0].mxu0
        %v659 = vadd.f32 0.0, %v658
        %v660 = vpop.f32.mrb[0].mxu0
        %v661 = vadd.f32 0.0, %v660
        %662 = vdwg.mxu0
        %v664 = vsel %vm588, %v538, 0
        %666 = vmatprep.subr.mxu0 %v531
        %667 = vmatpush1.msra.mxu0 %v530
        %668 = vmatprep.subr.mxu0 %v533
        %669 = vmatpush1.msra.mxu0 %v532
        %670 = vmatprep.subr.mxu0 %v535
        %671 = vmatpush1.msra.mxu0 %v534
        %672 = vmatprep.subr.mxu0 %v537
        %673 = vmatpush1.msra.mxu0 %v536
        %674 = vmatprep.subr.mxu0 0.0
        %675 = vmatpush1.msra.mxu0 0.0
        %676 = vmatprep.subr.mxu0 0.0
        %677 = vmatpush1.msra.mxu0 0.0
        %678 = vmatprep.subr.mxu0 0.0
        %679 = vmatpush1.msra.mxu0 0.0
        %680 = vmatprep.subr.mxu0 0.0
        %681 = vmatpush1.msra.mxu0 0.0
        %682 = vmatprep.subr.mxu0 0.0
        %683 = vmatpush1.msra.mxu0 0.0
        %684 = vmatprep.subr.mxu0 0.0
        %685 = vmatpush1.msra.mxu0 0.0
        %686 = vmatprep.subr.mxu0 0.0
        %687 = vmatpush1.msra.mxu0 0.0
        %688 = vmatprep.subr.mxu0 0.0
        %689 = vmatpush1.msra.mxu0 0.0
        %690 = vmatprep.subr.mxu0 0.0
        %691 = vmatpush1.msra.mxu0 0.0
        %692 = vmatprep.subr.mxu0 0.0
        %693 = vmatpush1.msra.mxu0 0.0
        %694 = vmatprep.subr.mxu0 0.0
        %695 = vmatpush1.msra.mxu0 0.0
        %696 = vmatprep.subr.mxu0 0.0
        %697 = vmatpush1.msra.mxu0 0.0
        %698 = vmatprep.subr.mxu0 0.0
        %699 = vmatpush1.msra.mxu0 0.0
        %700 = vmatprep.subr.mxu0 0.0
        %701 = vmatpush1.msra.mxu0 0.0
        %702 = vmatprep.subr.mxu0 0.0
        %703 = vmatpush1.msra.mxu0 0.0
        %704 = vmatprep.subr.mxu0 0.0
        %705 = vmatpush1.msra.mxu0 0.0
        %706 = vmatprep.subr.mxu0 0.0
        %707 = vmatpush1.msra.mxu0 0.0
        %708 = vmatprep.subr.mxu0 0.0
        %709 = vmatpush1.msra.mxu0 0.0
        %710 = vmatprep.subr.mxu0 0.0
        %711 = vmatpush1.msra.mxu0 0.0
        %712 = vmatprep.subr.mxu0 0.0
        %713 = vmatpush1.msra.mxu0 0.0
        %714 = vmatprep.subr.mxu0 0.0
        %715 = vmatpush1.msra.mxu0 0.0
        %716 = vmatprep.subr.mxu0 0.0
        %717 = vmatpush1.msra.mxu0 0.0
        %718 = vmatprep.subr.mxu0 0.0
        %719 = vmatpush1.msra.mxu0 0.0
        %720 = vmatprep.subr.mxu0 0.0
        %721 = vmatpush1.msra.mxu0 0.0
        %722 = vmatprep.subr.mxu0 0.0
        %723 = vmatpush1.msra.mxu0 0.0
        %724 = vmatprep.subr.mxu0 0.0
        %725 = vmatpush1.msra.mxu0 0.0
        %726 = vmatprep.subr.mxu0 0.0
        %727 = vmatpush1.msra.mxu0 0.0
        %728 = vmatprep.subr.mxu0 0.0
        %729 = vmatpush1.msra.mxu0 0.0
        %730 = vmatprep.mubr.f32.mxu0 0.0
        %731 = vmatmul.mubr.f32.gmra.mrb[0].mxu0 %v664
        %v732 = vpop.f32.mrb[0].mxu0
        %v733 = vadd.f32 %v659, %v732
        %v734 = vpop.f32.mrb[0].mxu0
        %v735 = vadd.f32 %v661, %v734
        %736 = vdwg.mxu0
        %vm737 = vmand %vm472, %vm478
        %vm738 = vmand %vm473, %vm479
        %v739 = vsel %vm737, 1, 0
        %v740 = vsel %vm738, 1, 0
        %vm741 = vcmp.eq.s32.totalorder %v739, 1
        %vm742 = vcmp.eq.s32.totalorder %v740, 1
        %743 = vrot.lane.b32.xlu0 0.0, 15
        %v744 = vpop.permute.xlu0 %743
        %745 = vrot.lane.b32.xlu0 %v459, 15
        %v746 = vpop.permute.xlu0 %745
        %747 = vrot.lane.b32.xlu0 %v460, 15
        %v748 = vpop.permute.xlu0 %747
        %749 = vrot.lane.b32.xlu0 %v461, 15
        %v750 = vpop.permute.xlu0 %749
        %751 = vrot.lane.b32.xlu0 %v462, 15
        %v752 = vpop.permute.xlu0 %751
        %753 = vrot.lane.b32.xlu0 %v463, 15
        %v754 = vpop.permute.xlu0 %753
        %755 = vrot.lane.b32.xlu0 %v464, 15
        %v756 = vpop.permute.xlu0 %755
        %757 = vrot.lane.b32.xlu0 %v465, 15
        %v758 = vpop.permute.xlu0 %757
        %759 = vrot.lane.b32.xlu0 %v466, 15
        %v760 = vpop.permute.xlu0 %759
        %vm761 = vcmask 121856
        %v762 = vsel %vm761, %v744, %v746
        %v763 = vsel %vm761, %v746, %v748
        %v764 = vsel %vm761, %v744, %v750
        %v765 = vsel %vm761, %v750, %v752
        %v766 = vsel %vm761, %v744, %v754
        %v767 = vsel %vm761, %v754, %v756
        %v768 = vsel %vm761, %v744, %v758
        %v769 = vsel %vm761, %v758, %v760
        %v778 = vsel %vm741, %v762, 0.0
        %v779 = vsel %vm742, %v763, 0.0
        %v780 = vsel %vm741, %v764, 0.0
        %v781 = vsel %vm742, %v765, 0.0
        %v782 = vsel %vm741, %v766, 0.0
        %v783 = vsel %vm742, %v767, 0.0
        %v784 = vsel %vm741, %v768, 0.0
        %v785 = vsel %vm742, %v769, 0.0
        %s786 = scalar_lea.vmem %s4, 16
        %v787 = vld [vmem:[%s786] sm:$0xff]
        %v789 = vsel %vm588, %v787, 0
        %791 = vmatprep.subr.mxu0 %v779
        %792 = vmatpush1.msra.mxu0 %v778
        %793 = vmatprep.subr.mxu0 %v781
        %794 = vmatpush1.msra.mxu0 %v780
        %795 = vmatprep.subr.mxu0 %v783
        %796 = vmatpush1.msra.mxu0 %v782
        %797 = vmatprep.subr.mxu0 %v785
        %798 = vmatpush1.msra.mxu0 %v784
        %799 = vmatprep.subr.mxu0 0.0
        %800 = vmatpush1.msra.mxu0 0.0
        %801 = vmatprep.subr.mxu0 0.0
        %802 = vmatpush1.msra.mxu0 0.0
        %803 = vmatprep.subr.mxu0 0.0
        %804 = vmatpush1.msra.mxu0 0.0
        %805 = vmatprep.subr.mxu0 0.0
        %806 = vmatpush1.msra.mxu0 0.0
        %807 = vmatprep.subr.mxu0 0.0
        %808 = vmatpush1.msra.mxu0 0.0
        %809 = vmatprep.subr.mxu0 0.0
        %810 = vmatpush1.msra.mxu0 0.0
        %811 = vmatprep.subr.mxu0 0.0
        %812 = vmatpush1.msra.mxu0 0.0
        %813 = vmatprep.subr.mxu0 0.0
        %814 = vmatpush1.msra.mxu0 0.0
        %815 = vmatprep.subr.mxu0 0.0
        %816 = vmatpush1.msra.mxu0 0.0
        %817 = vmatprep.subr.mxu0 0.0
        %818 = vmatpush1.msra.mxu0 0.0
        %819 = vmatprep.subr.mxu0 0.0
        %820 = vmatpush1.msra.mxu0 0.0
        %821 = vmatprep.subr.mxu0 0.0
        %822 = vmatpush1.msra.mxu0 0.0
        %823 = vmatprep.subr.mxu0 0.0
        %824 = vmatpush1.msra.mxu0 0.0
        %825 = vmatprep.subr.mxu0 0.0
        %826 = vmatpush1.msra.mxu0 0.0
        %827 = vmatprep.subr.mxu0 0.0
        %828 = vmatpush1.msra.mxu0 0.0
        %829 = vmatprep.subr.mxu0 0.0
        %830 = vmatpush1.msra.mxu0 0.0
        %831 = vmatprep.subr.mxu0 0.0
        %832 = vmatpush1.msra.mxu0 0.0
        %833 = vmatprep.subr.mxu0 0.0
        %834 = vmatpush1.msra.mxu0 0.0
        %835 = vmatprep.subr.mxu0 0.0
        %836 = vmatpush1.msra.mxu0 0.0
        %837 = vmatprep.subr.mxu0 0.0
        %838 = vmatpush1.msra.mxu0 0.0
        %839 = vmatprep.subr.mxu0 0.0
        %840 = vmatpush1.msra.mxu0 0.0
        %841 = vmatprep.subr.mxu0 0.0
        %842 = vmatpush1.msra.mxu0 0.0
        %843 = vmatprep.subr.mxu0 0.0
        %844 = vmatpush1.msra.mxu0 0.0
        %845 = vmatprep.subr.mxu0 0.0
        %846 = vmatpush1.msra.mxu0 0.0
        %847 = vmatprep.subr.mxu0 0.0
        %848 = vmatpush1.msra.mxu0 0.0
        %849 = vmatprep.subr.mxu0 0.0
        %850 = vmatpush1.msra.mxu0 0.0
        %851 = vmatprep.subr.mxu0 0.0
        %852 = vmatpush1.msra.mxu0 0.0
        %853 = vmatprep.subr.mxu0 0.0
        %854 = vmatpush1.msra.mxu0 0.0
        %855 = vmatprep.mubr.f32.mxu0 0.0
        %856 = vmatmul.mubr.f32.gmra.mrb[0].mxu0 %v789
        %v857 = vpop.f32.mrb[0].mxu0
        %v858 = vadd.f32 0.0, %v857
        %v859 = vpop.f32.mrb[0].mxu0
        %v860 = vadd.f32 0.0, %v859
        %861 = vdwg.mxu0
        %v862 = vadd.f32 %v733, %v858
        %v863 = vadd.f32 %v735, %v860
        %v864 = vsel %vm476, 1, 0
        %v865 = vsel %vm477, 1, 0
        %vm866 = vcmp.eq.s32.totalorder %v864, 1
        %vm867 = vcmp.eq.s32.totalorder %v865, 1
        %868 = vrot.lane.b32.xlu0 0.0, 1
        %v869 = vpop.permute.xlu0 %868
        %870 = vrot.lane.b32.xlu0 %v459, 1
        %v871 = vpop.permute.xlu0 %870
        %872 = vrot.lane.b32.xlu0 %v460, 1
        %v873 = vpop.permute.xlu0 %872
        %874 = vrot.lane.b32.xlu0 %v461, 1
        %v875 = vpop.permute.xlu0 %874
        %876 = vrot.lane.b32.xlu0 %v462, 1
        %v877 = vpop.permute.xlu0 %876
        %878 = vrot.lane.b32.xlu0 %v463, 1
        %v879 = vpop.permute.xlu0 %878
        %880 = vrot.lane.b32.xlu0 %v464, 1
        %v881 = vpop.permute.xlu0 %880
        %882 = vrot.lane.b32.xlu0 %v465, 1
        %v883 = vpop.permute.xlu0 %882
        %884 = vrot.lane.b32.xlu0 %v466, 1
        %v885 = vpop.permute.xlu0 %884
        %vm886 = vcmask 7168
        %v887 = vsel %vm886, %v869, %v871
        %v888 = vsel %vm886, %v871, %v873
        %v889 = vsel %vm886, %v869, %v875
        %v890 = vsel %vm886, %v875, %v877
        %v891 = vsel %vm886, %v869, %v879
        %v892 = vsel %vm886, %v879, %v881
        %v893 = vsel %vm886, %v869, %v883
        %v894 = vsel %vm886, %v883, %v885
        %v903 = vsel %vm866, %v887, 0.0
        %v904 = vsel %vm867, %v888, 0.0
        %v905 = vsel %vm866, %v889, 0.0
        %v906 = vsel %vm867, %v890, 0.0
        %v907 = vsel %vm866, %v891, 0.0
        %v908 = vsel %vm867, %v892, 0.0
        %v909 = vsel %vm866, %v893, 0.0
        %v910 = vsel %vm867, %v894, 0.0
        %s911 = scalar_lea.vmem %s4, 24
        %v912 = vld [vmem:[%s911] sm:$0xff]
        %v914 = vsel %vm588, %v912, 0
        %916 = vmatprep.subr.mxu0 %v904
        %917 = vmatpush1.msra.mxu0 %v903
        %918 = vmatprep.subr.mxu0 %v906
        %919 = vmatpush1.msra.mxu0 %v905
        %920 = vmatprep.subr.mxu0 %v908
        %921 = vmatpush1.msra.mxu0 %v907
        %922 = vmatprep.subr.mxu0 %v910
        %923 = vmatpush1.msra.mxu0 %v909
        %924 = vmatprep.subr.mxu0 0.0
        %925 = vmatpush1.msra.mxu0 0.0
        %926 = vmatprep.subr.mxu0 0.0
        %927 = vmatpush1.msra.mxu0 0.0
        %928 = vmatprep.subr.mxu0 0.0
        %929 = vmatpush1.msra.mxu0 0.0
        %930 = vmatprep.subr.mxu0 0.0
        %931 = vmatpush1.msra.mxu0 0.0
        %932 = vmatprep.subr.mxu0 0.0
        %933 = vmatpush1.msra.mxu0 0.0
        %934 = vmatprep.subr.mxu0 0.0
        %935 = vmatpush1.msra.mxu0 0.0
        %936 = vmatprep.subr.mxu0 0.0
        %937 = vmatpush1.msra.mxu0 0.0
        %938 = vmatprep.subr.mxu0 0.0
        %939 = vmatpush1.msra.mxu0 0.0
        %940 = vmatprep.subr.mxu0 0.0
        %941 = vmatpush1.msra.mxu0 0.0
        %942 = vmatprep.subr.mxu0 0.0
        %943 = vmatpush1.msra.mxu0 0.0
        %944 = vmatprep.subr.mxu0 0.0
        %945 = vmatpush1.msra.mxu0 0.0
        %946 = vmatprep.subr.mxu0 0.0
        %947 = vmatpush1.msra.mxu0 0.0
        %948 = vmatprep.subr.mxu0 0.0
        %949 = vmatpush1.msra.mxu0 0.0
        %950 = vmatprep.subr.mxu0 0.0
        %951 = vmatpush1.msra.mxu0 0.0
        %952 = vmatprep.subr.mxu0 0.0
        %953 = vmatpush1.msra.mxu0 0.0
        %954 = vmatprep.subr.mxu0 0.0
        %955 = vmatpush1.msra.mxu0 0.0
        %956 = vmatprep.subr.mxu0 0.0
        %957 = vmatpush1.msra.mxu0 0.0
        %958 = vmatprep.subr.mxu0 0.0
        %959 = vmatpush1.msra.mxu0 0.0
        %960 = vmatprep.subr.mxu0 0.0
        %961 = vmatpush1.msra.mxu0 0.0
        %962 = vmatprep.subr.mxu0 0.0
        %963 = vmatpush1.msra.mxu0 0.0
        %964 = vmatprep.subr.mxu0 0.0
        %965 = vmatpush1.msra.mxu0 0.0
        %966 = vmatprep.subr.mxu0 0.0
        %967 = vmatpush1.msra.mxu0 0.0
        %968 = vmatprep.subr.mxu0 0.0
        %969 = vmatpush1.msra.mxu0 0.0
        %970 = vmatprep.subr.mxu0 0.0
        %971 = vmatpush1.msra.mxu0 0.0
        %972 = vmatprep.subr.mxu0 0.0
        %973 = vmatpush1.msra.mxu0 0.0
        %974 = vmatprep.subr.mxu0 0.0
        %975 = vmatpush1.msra.mxu0 0.0
        %976 = vmatprep.subr.mxu0 0.0
        %977 = vmatpush1.msra.mxu0 0.0
        %978 = vmatprep.subr.mxu0 0.0
        %979 = vmatpush1.msra.mxu0 0.0
        %980 = vmatprep.mubr.f32.mxu0 0.0
        %981 = vmatmul.mubr.f32.gmra.mrb[0].mxu0 %v914
        %v982 = vpop.f32.mrb[0].mxu0
        %v983 = vadd.f32 0.0, %v982
        %v984 = vpop.f32.mrb[0].mxu0
        %v985 = vadd.f32 0.0, %v984
        %986 = vdwg.mxu0
        %v987 = vadd.f32 %v862, %v983
        %v988 = vadd.f32 %v863, %v985
        %s989 = scalar_lea.vmem %s4, 32
        %v990 = vld [vmem:[%s989] sm:$0xff]
        %v992 = vsel %vm588, %v990, 0
        %994 = vmatprep.subr.mxu0 %v460
        %995 = vmatpush1.msra.mxu0 %v459
        %996 = vmatprep.subr.mxu0 %v462
        %997 = vmatpush1.msra.mxu0 %v461
        %998 = vmatprep.subr.mxu0 %v464
        %999 = vmatpush1.msra.mxu0 %v463
        %1000 = vmatprep.subr.mxu0 %v466
        %1001 = vmatpush1.msra.mxu0 %v465
        %1002 = vmatprep.subr.mxu0 0.0
        %1003 = vmatpush1.msra.mxu0 0.0
        %1004 = vmatprep.subr.mxu0 0.0
        %1005 = vmatpush1.msra.mxu0 0.0
        %1006 = vmatprep.subr.mxu0 0.0
        %1007 = vmatpush1.msra.mxu0 0.0
        %1008 = vmatprep.subr.mxu0 0.0
        %1009 = vmatpush1.msra.mxu0 0.0
        %1010 = vmatprep.subr.mxu0 0.0
        %1011 = vmatpush1.msra.mxu0 0.0
        %1012 = vmatprep.subr.mxu0 0.0
        %1013 = vmatpush1.msra.mxu0 0.0
        %1014 = vmatprep.subr.mxu0 0.0
        %1015 = vmatpush1.msra.mxu0 0.0
        %1016 = vmatprep.subr.mxu0 0.0
        %1017 = vmatpush1.msra.mxu0 0.0
        %1018 = vmatprep.subr.mxu0 0.0
        %1019 = vmatpush1.msra.mxu0 0.0
        %1020 = vmatprep.subr.mxu0 0.0
        %1021 = vmatpush1.msra.mxu0 0.0
        %1022 = vmatprep.subr.mxu0 0.0
        %1023 = vmatpush1.msra.mxu0 0.0
        %1024 = vmatprep.subr.mxu0 0.0
        %1025 = vmatpush1.msra.mxu0 0.0
        %1026 = vmatprep.subr.mxu0 0.0
        %1027 = vmatpush1.msra.mxu0 0.0
        %1028 = vmatprep.subr.mxu0 0.0
        %1029 = vmatpush1.msra.mxu0 0.0
        %1030 = vmatprep.subr.mxu0 0.0
        %1031 = vmatpush1.msra.mxu0 0.0
        %1032 = vmatprep.subr.mxu0 0.0
        %1033 = vmatpush1.msra.mxu0 0.0
        %1034 = vmatprep.subr.mxu0 0.0
        %1035 = vmatpush1.msra.mxu0 0.0
        %1036 = vmatprep.subr.mxu0 0.0
        %1037 = vmatpush1.msra.mxu0 0.0
        %1038 = vmatprep.subr.mxu0 0.0
        %1039 = vmatpush1.msra.mxu0 0.0
        %1040 = vmatprep.subr.mxu0 0.0
        %1041 = vmatpush1.msra.mxu0 0.0
        %1042 = vmatprep.subr.mxu0 0.0
        %1043 = vmatpush1.msra.mxu0 0.0
        %1044 = vmatprep.subr.mxu0 0.0
        %1045 = vmatpush1.msra.mxu0 0.0
        %1046 = vmatprep.subr.mxu0 0.0
        %1047 = vmatpush1.msra.mxu0 0.0
        %1048 = vmatprep.subr.mxu0 0.0
        %1049 = vmatpush1.msra.mxu0 0.0
        %1050 = vmatprep.subr.mxu0 0.0
        %1051 = vmatpush1.msra.mxu0 0.0
        %1052 = vmatprep.subr.mxu0 0.0
        %1053 = vmatpush1.msra.mxu0 0.0
        %1054 = vmatprep.subr.mxu0 0.0
        %1055 = vmatpush1.msra.mxu0 0.0
        %1056 = vmatprep.subr.mxu0 0.0
        %1057 = vmatpush1.msra.mxu0 0.0
        %1058 = vmatprep.mubr.f32.mxu0 0.0
        %1059 = vmatmul.mubr.f32.gmra.mrb[0].mxu0 %v992
        %v1060 = vpop.f32.mrb[0].mxu0
        %v1061 = vadd.f32 0.0, %v1060
        %v1062 = vpop.f32.mrb[0].mxu0
        %v1063 = vadd.f32 0.0, %v1062
        %1064 = vdwg.mxu0
        %v1065 = vadd.f32 %v987, %v1061
        %v1066 = vadd.f32 %v988, %v1063
        %v1067 = vsel %vm478, 1, 0
        %v1068 = vsel %vm479, 1, 0
        %vm1069 = vcmp.eq.s32.totalorder %v1067, 1
        %vm1070 = vcmp.eq.s32.totalorder %v1068, 1
        %1071 = vrot.lane.b32.xlu0 %v459, 127
        %v1072 = vpop.permute.xlu0 %1071
        %1073 = vrot.lane.b32.xlu0 %v460, 127
        %v1074 = vpop.permute.xlu0 %1073
        %1075 = vrot.lane.b32.xlu0 0.0, 127
        %v1076 = vpop.permute.xlu0 %1075
        %1077 = vrot.lane.b32.xlu0 %v461, 127
        %v1078 = vpop.permute.xlu0 %1077
        %1079 = vrot.lane.b32.xlu0 %v462, 127
        %v1080 = vpop.permute.xlu0 %1079
        %1081 = vrot.lane.b32.xlu0 %v463, 127
        %v1082 = vpop.permute.xlu0 %1081
        %1083 = vrot.lane.b32.xlu0 %v464, 127
        %v1084 = vpop.permute.xlu0 %1083
        %1085 = vrot.lane.b32.xlu0 %v465, 127
        %v1086 = vpop.permute.xlu0 %1085
        %1087 = vrot.lane.b32.xlu0 %v466, 127
        %v1088 = vpop.permute.xlu0 %1087
        %vm1089 = vcmask 1039360
        %v1090 = vsel %vm1089, %v1072, %v1074
        %v1091 = vsel %vm1089, %v1074, %v1076
        %v1092 = vsel %vm1089, %v1078, %v1080
        %v1093 = vsel %vm1089, %v1080, %v1076
        %v1094 = vsel %vm1089, %v1082, %v1084
        %v1095 = vsel %vm1089, %v1084, %v1076
        %v1096 = vsel %vm1089, %v1086, %v1088
        %v1097 = vsel %vm1089, %v1088, %v1076
        %v1106 = vsel %vm1069, %v1090, 0.0
        %v1107 = vsel %vm1070, %v1091, 0.0
        %v1108 = vsel %vm1069, %v1092, 0.0
        %v1109 = vsel %vm1070, %v1093, 0.0
        %v1110 = vsel %vm1069, %v1094, 0.0
        %v1111 = vsel %vm1070, %v1095, 0.0
        %v1112 = vsel %vm1069, %v1096, 0.0
        %v1113 = vsel %vm1070, %v1097, 0.0
        %s1114 = scalar_lea.vmem %s4, 40
        %v1115 = vld [vmem:[%s1114] sm:$0xff]
        %v1117 = vsel %vm588, %v1115, 0
        %1119 = vmatprep.subr.mxu0 %v1107
        %1120 = vmatpush1.msra.mxu0 %v1106
        %1121 = vmatprep.subr.mxu0 %v1109
        %1122 = vmatpush1.msra.mxu0 %v1108
        %1123 = vmatprep.subr.mxu0 %v1111
        %1124 = vmatpush1.msra.mxu0 %v1110
        %1125 = vmatprep.subr.mxu0 %v1113
        %1126 = vmatpush1.msra.mxu0 %v1112
        %1127 = vmatprep.subr.mxu0 0.0
        %1128 = vmatpush1.msra.mxu0 0.0
        %1129 = vmatprep.subr.mxu0 0.0
        %1130 = vmatpush1.msra.mxu0 0.0
        %1131 = vmatprep.subr.mxu0 0.0
        %1132 = vmatpush1.msra.mxu0 0.0
        %1133 = vmatprep.subr.mxu0 0.0
        %1134 = vmatpush1.msra.mxu0 0.0
        %1135 = vmatprep.subr.mxu0 0.0
        %1136 = vmatpush1.msra.mxu0 0.0
        %1137 = vmatprep.subr.mxu0 0.0
        %1138 = vmatpush1.msra.mxu0 0.0
        %1139 = vmatprep.subr.mxu0 0.0
        %1140 = vmatpush1.msra.mxu0 0.0
        %1141 = vmatprep.subr.mxu0 0.0
        %1142 = vmatpush1.msra.mxu0 0.0
        %1143 = vmatprep.subr.mxu0 0.0
        %1144 = vmatpush1.msra.mxu0 0.0
        %1145 = vmatprep.subr.mxu0 0.0
        %1146 = vmatpush1.msra.mxu0 0.0
        %1147 = vmatprep.subr.mxu0 0.0
        %1148 = vmatpush1.msra.mxu0 0.0
        %1149 = vmatprep.subr.mxu0 0.0
        %1150 = vmatpush1.msra.mxu0 0.0
        %1151 = vmatprep.subr.mxu0 0.0
        %1152 = vmatpush1.msra.mxu0 0.0
        %1153 = vmatprep.subr.mxu0 0.0
        %1154 = vmatpush1.msra.mxu0 0.0
        %1155 = vmatprep.subr.mxu0 0.0
        %1156 = vmatpush1.msra.mxu0 0.0
        %1157 = vmatprep.subr.mxu0 0.0
        %1158 = vmatpush1.msra.mxu0 0.0
        %1159 = vmatprep.subr.mxu0 0.0
        %1160 = vmatpush1.msra.mxu0 0.0
        %1161 = vmatprep.subr.mxu0 0.0
        %1162 = vmatpush1.msra.mxu0 0.0
        %1163 = vmatprep.subr.mxu0 0.0
        %1164 = vmatpush1.msra.mxu0 0.0
        %1165 = vmatprep.subr.mxu0 0.0
        %1166 = vmatpush1.msra.mxu0 0.0
        %1167 = vmatprep.subr.mxu0 0.0
        %1168 = vmatpush1.msra.mxu0 0.0
        %1169 = vmatprep.subr.mxu0 0.0
        %1170 = vmatpush1.msra.mxu0 0.0
        %1171 = vmatprep.subr.mxu0 0.0
        %1172 = vmatpush1.msra.mxu0 0.0
        %1173 = vmatprep.subr.mxu0 0.0
        %1174 = vmatpush1.msra.mxu0 0.0
        %1175 = vmatprep.subr.mxu0 0.0
        %1176 = vmatpush1.msra.mxu0 0.0
        %1177 = vmatprep.subr.mxu0 0.0
        %1178 = vmatpush1.msra.mxu0 0.0
        %1179 = vmatprep.subr.mxu0 0.0
        %1180 = vmatpush1.msra.mxu0 0.0
        %1181 = vmatprep.subr.mxu0 0.0
        %1182 = vmatpush1.msra.mxu0 0.0
        %1183 = vmatprep.mubr.f32.mxu0 0.0
        %1184 = vmatmul.mubr.f32.gmra.mrb[0].mxu0 %v1117
        %v1185 = vpop.f32.mrb[0].mxu0
        %v1186 = vadd.f32 0.0, %v1185
        %v1187 = vpop.f32.mrb[0].mxu0
        %v1188 = vadd.f32 0.0, %v1187
        %1189 = vdwg.mxu0
        %v1190 = vadd.f32 %v1065, %v1186
        %v1191 = vadd.f32 %v1066, %v1188
        %vm1192 = vmand %vm474, %vm476
        %vm1193 = vmand %vm475, %vm477
        %v1194 = vsel %vm1192, 1, 0
        %v1195 = vsel %vm1193, 1, 0
        %vm1196 = vcmp.eq.s32.totalorder %v1194, 1
        %vm1197 = vcmp.eq.s32.totalorder %v1195, 1
        %1198 = vrot.lane.b32.xlu0 %v459, 113
        %v1199 = vpop.permute.xlu0 %1198
        %1200 = vrot.lane.b32.xlu0 %v460, 113
        %v1201 = vpop.permute.xlu0 %1200
        %1202 = vrot.lane.b32.xlu0 0.0, 113
        %v1203 = vpop.permute.xlu0 %1202
        %1204 = vrot.lane.b32.xlu0 %v461, 113
        %v1205 = vpop.permute.xlu0 %1204
        %1206 = vrot.lane.b32.xlu0 %v462, 113
        %v1207 = vpop.permute.xlu0 %1206
        %1208 = vrot.lane.b32.xlu0 %v463, 113
        %v1209 = vpop.permute.xlu0 %1208
        %1210 = vrot.lane.b32.xlu0 %v464, 113
        %v1211 = vpop.permute.xlu0 %1210
        %1212 = vrot.lane.b32.xlu0 %v465, 113
        %v1213 = vpop.permute.xlu0 %1212
        %1214 = vrot.lane.b32.xlu0 %v466, 113
        %v1215 = vpop.permute.xlu0 %1214
        %vm1216 = vcmask 924672
        %v1217 = vsel %vm1216, %v1199, %v1201
        %v1218 = vsel %vm1216, %v1201, %v1203
        %v1219 = vsel %vm1216, %v1205, %v1207
        %v1220 = vsel %vm1216, %v1207, %v1203
        %v1221 = vsel %vm1216, %v1209, %v1211
        %v1222 = vsel %vm1216, %v1211, %v1203
        %v1223 = vsel %vm1216, %v1213, %v1215
        %v1224 = vsel %vm1216, %v1215, %v1203
        %v1233 = vsel %vm1196, %v1217, 0.0
        %v1234 = vsel %vm1197, %v1218, 0.0
        %v1235 = vsel %vm1196, %v1219, 0.0
        %v1236 = vsel %vm1197, %v1220, 0.0
        %v1237 = vsel %vm1196, %v1221, 0.0
        %v1238 = vsel %vm1197, %v1222, 0.0
        %v1239 = vsel %vm1196, %v1223, 0.0
        %v1240 = vsel %vm1197, %v1224, 0.0
        %s1241 = scalar_lea.vmem %s4, 48
        %v1242 = vld [vmem:[%s1241] sm:$0xff]
        %v1244 = vsel %vm588, %v1242, 0
        %1246 = vmatprep.subr.mxu0 %v1234
        %1247 = vmatpush1.msra.mxu0 %v1233
        %1248 = vmatprep.subr.mxu0 %v1236
        %1249 = vmatpush1.msra.mxu0 %v1235
        %1250 = vmatprep.subr.mxu0 %v1238
        %1251 = vmatpush1.msra.mxu0 %v1237
        %1252 = vmatprep.subr.mxu0 %v1240
        %1253 = vmatpush1.msra.mxu0 %v1239
        %1254 = vmatprep.subr.mxu0 0.0
        %1255 = vmatpush1.msra.mxu0 0.0
        %1256 = vmatprep.subr.mxu0 0.0
        %1257 = vmatpush1.msra.mxu0 0.0
        %1258 = vmatprep.subr.mxu0 0.0
        %1259 = vmatpush1.msra.mxu0 0.0
        %1260 = vmatprep.subr.mxu0 0.0
        %1261 = vmatpush1.msra.mxu0 0.0
        %1262 = vmatprep.subr.mxu0 0.0
        %1263 = vmatpush1.msra.mxu0 0.0
        %1264 = vmatprep.subr.mxu0 0.0
        %1265 = vmatpush1.msra.mxu0 0.0
        %1266 = vmatprep.subr.mxu0 0.0
        %1267 = vmatpush1.msra.mxu0 0.0
        %1268 = vmatprep.subr.mxu0 0.0
        %1269 = vmatpush1.msra.mxu0 0.0
        %1270 = vmatprep.subr.mxu0 0.0
        %1271 = vmatpush1.msra.mxu0 0.0
        %1272 = vmatprep.subr.mxu0 0.0
        %1273 = vmatpush1.msra.mxu0 0.0
        %1274 = vmatprep.subr.mxu0 0.0
        %1275 = vmatpush1.msra.mxu0 0.0
        %1276 = vmatprep.subr.mxu0 0.0
        %1277 = vmatpush1.msra.mxu0 0.0
        %1278 = vmatprep.subr.mxu0 0.0
        %1279 = vmatpush1.msra.mxu0 0.0
        %1280 = vmatprep.subr.mxu0 0.0
        %1281 = vmatpush1.msra.mxu0 0.0
        %1282 = vmatprep.subr.mxu0 0.0
        %1283 = vmatpush1.msra.mxu0 0.0
        %1284 = vmatprep.subr.mxu0 0.0
        %1285 = vmatpush1.msra.mxu0 0.0
        %1286 = vmatprep.subr.mxu0 0.0
        %1287 = vmatpush1.msra.mxu0 0.0
        %1288 = vmatprep.subr.mxu0 0.0
        %1289 = vmatpush1.msra.mxu0 0.0
        %1290 = vmatprep.subr.mxu0 0.0
        %1291 = vmatpush1.msra.mxu0 0.0
        %1292 = vmatprep.subr.mxu0 0.0
        %1293 = vmatpush1.msra.mxu0 0.0
        %1294 = vmatprep.subr.mxu0 0.0
        %1295 = vmatpush1.msra.mxu0 0.0
        %1296 = vmatprep.subr.mxu0 0.0
        %1297 = vmatpush1.msra.mxu0 0.0
        %1298 = vmatprep.subr.mxu0 0.0
        %1299 = vmatpush1.msra.mxu0 0.0
        %1300 = vmatprep.subr.mxu0 0.0
        %1301 = vmatpush1.msra.mxu0 0.0
        %1302 = vmatprep.subr.mxu0 0.0
        %1303 = vmatpush1.msra.mxu0 0.0
        %1304 = vmatprep.subr.mxu0 0.0
        %1305 = vmatpush1.msra.mxu0 0.0
        %1306 = vmatprep.subr.mxu0 0.0
        %1307 = vmatpush1.msra.mxu0 0.0
        %1308 = vmatprep.subr.mxu0 0.0
        %1309 = vmatpush1.msra.mxu0 0.0
        %1310 = vmatprep.mubr.f32.mxu0 0.0
        %1311 = vmatmul.mubr.f32.gmra.mrb[0].mxu0 %v1244
        %v1312 = vpop.f32.mrb[0].mxu0
        %v1313 = vadd.f32 0.0, %v1312
        %v1314 = vpop.f32.mrb[0].mxu0
        %v1315 = vadd.f32 0.0, %v1314
        %1316 = vdwg.mxu0
        %v1317 = vadd.f32 %v1190, %v1313
        %v1318 = vadd.f32 %v1191, %v1315
        %v1319 = vsel %vm474, 1, 0
        %v1320 = vsel %vm475, 1, 0
        %vm1321 = vcmp.eq.s32.totalorder %v1319, 1
        %vm1322 = vcmp.eq.s32.totalorder %v1320, 1
        %1323 = vrot.lane.b32.xlu0 %v459, 112
        %v1324 = vpop.permute.xlu0 %1323
        %1325 = vrot.lane.b32.xlu0 %v460, 112
        %v1326 = vpop.permute.xlu0 %1325
        %1327 = vrot.lane.b32.xlu0 0.0, 112
        %v1328 = vpop.permute.xlu0 %1327
        %1329 = vrot.lane.b32.xlu0 %v461, 112
        %v1330 = vpop.permute.xlu0 %1329
        %1331 = vrot.lane.b32.xlu0 %v462, 112
        %v1332 = vpop.permute.xlu0 %1331
        %1333 = vrot.lane.b32.xlu0 %v463, 112
        %v1334 = vpop.permute.xlu0 %1333
        %1335 = vrot.lane.b32.xlu0 %v464, 112
        %v1336 = vpop.permute.xlu0 %1335
        %1337 = vrot.lane.b32.xlu0 %v465, 112
        %v1338 = vpop.permute.xlu0 %1337
        %1339 = vrot.lane.b32.xlu0 %v466, 112
        %v1340 = vpop.permute.xlu0 %1339
        %vm1341 = vcmask 916480
        %v1342 = vsel %vm1341, %v1324, %v1326
        %v1343 = vsel %vm1341, %v1326, %v1328
        %v1344 = vsel %vm1341, %v1330, %v1332
        %v1345 = vsel %vm1341, %v1332, %v1328
        %v1346 = vsel %vm1341, %v1334, %v1336
        %v1347 = vsel %vm1341, %v1336, %v1328
        %v1348 = vsel %vm1341, %v1338, %v1340
        %v1349 = vsel %vm1341, %v1340, %v1328
        %v1358 = vsel %vm1321, %v1342, 0.0
        %v1359 = vsel %vm1322, %v1343, 0.0
        %v1360 = vsel %vm1321, %v1344, 0.0
        %v1361 = vsel %vm1322, %v1345, 0.0
        %v1362 = vsel %vm1321, %v1346, 0.0
        %v1363 = vsel %vm1322, %v1347, 0.0
        %v1364 = vsel %vm1321, %v1348, 0.0
        %v1365 = vsel %vm1322, %v1349, 0.0
        %s1366 = scalar_lea.vmem %s4, 56
        %v1367 = vld [vmem:[%s1366] sm:$0xff]
        %v1369 = vsel %vm588, %v1367, 0
        %1371 = vmatprep.subr.mxu0 %v1359
        %1372 = vmatpush1.msra.mxu0 %v1358
        %1373 = vmatprep.subr.mxu0 %v1361
        %1374 = vmatpush1.msra.mxu0 %v1360
        %1375 = vmatprep.subr.mxu0 %v1363
        %1376 = vmatpush1.msra.mxu0 %v1362
        %1377 = vmatprep.subr.mxu0 %v1365
        %1378 = vmatpush1.msra.mxu0 %v1364
        %1379 = vmatprep.subr.mxu0 0.0
        %1380 = vmatpush1.msra.mxu0 0.0
        %1381 = vmatprep.subr.mxu0 0.0
        %1382 = vmatpush1.msra.mxu0 0.0
        %1383 = vmatprep.subr.mxu0 0.0
        %1384 = vmatpush1.msra.mxu0 0.0
        %1385 = vmatprep.subr.mxu0 0.0
        %1386 = vmatpush1.msra.mxu0 0.0
        %1387 = vmatprep.subr.mxu0 0.0
        %1388 = vmatpush1.msra.mxu0 0.0
        %1389 = vmatprep.subr.mxu0 0.0
        %1390 = vmatpush1.msra.mxu0 0.0
        %1391 = vmatprep.subr.mxu0 0.0
        %1392 = vmatpush1.msra.mxu0 0.0
        %1393 = vmatprep.subr.mxu0 0.0
        %1394 = vmatpush1.msra.mxu0 0.0
        %1395 = vmatprep.subr.mxu0 0.0
        %1396 = vmatpush1.msra.mxu0 0.0
        %1397 = vmatprep.subr.mxu0 0.0
        %1398 = vmatpush1.msra.mxu0 0.0
        %1399 = vmatprep.subr.mxu0 0.0
        %1400 = vmatpush1.msra.mxu0 0.0
        %1401 = vmatprep.subr.mxu0 0.0
        %1402 = vmatpush1.msra.mxu0 0.0
        %1403 = vmatprep.subr.mxu0 0.0
        %1404 = vmatpush1.msra.mxu0 0.0
        %1405 = vmatprep.subr.mxu0 0.0
        %1406 = vmatpush1.msra.mxu0 0.0
        %1407 = vmatprep.subr.mxu0 0.0
        %1408 = vmatpush1.msra.mxu0 0.0
        %1409 = vmatprep.subr.mxu0 0.0
        %1410 = vmatpush1.msra.mxu0 0.0
        %1411 = vmatprep.subr.mxu0 0.0
        %1412 = vmatpush1.msra.mxu0 0.0
        %1413 = vmatprep.subr.mxu0 0.0
        %1414 = vmatpush1.msra.mxu0 0.0
        %1415 = vmatprep.subr.mxu0 0.0
        %1416 = vmatpush1.msra.mxu0 0.0
        %1417 = vmatprep.subr.mxu0 0.0
        %1418 = vmatpush1.msra.mxu0 0.0
        %1419 = vmatprep.subr.mxu0 0.0
        %1420 = vmatpush1.msra.mxu0 0.0
        %1421 = vmatprep.subr.mxu0 0.0
        %1422 = vmatpush1.msra.mxu0 0.0
        %1423 = vmatprep.subr.mxu0 0.0
        %1424 = vmatpush1.msra.mxu0 0.0
        %1425 = vmatprep.subr.mxu0 0.0
        %1426 = vmatpush1.msra.mxu0 0.0
        %1427 = vmatprep.subr.mxu0 0.0
        %1428 = vmatpush1.msra.mxu0 0.0
        %1429 = vmatprep.subr.mxu0 0.0
        %1430 = vmatpush1.msra.mxu0 0.0
        %1431 = vmatprep.subr.mxu0 0.0
        %1432 = vmatpush1.msra.mxu0 0.0
        %1433 = vmatprep.subr.mxu0 0.0
        %1434 = vmatpush1.msra.mxu0 0.0
        %1435 = vmatprep.mubr.f32.mxu0 0.0
        %1436 = vmatmul.mubr.f32.gmra.mrb[0].mxu0 %v1369
        %v1437 = vpop.f32.mrb[0].mxu0
        %v1438 = vadd.f32 0.0, %v1437
        %v1439 = vpop.f32.mrb[0].mxu0
        %v1440 = vadd.f32 0.0, %v1439
        %1441 = vdwg.mxu0
        %v1442 = vadd.f32 %v1317, %v1438
        %v1443 = vadd.f32 %v1318, %v1440
        %vm1444 = vmand %vm474, %vm478
        %vm1445 = vmand %vm475, %vm479
        %v1446 = vsel %vm1444, 1, 0
        %v1447 = vsel %vm1445, 1, 0
        %vm1448 = vcmp.eq.s32.totalorder %v1446, 1
        %vm1449 = vcmp.eq.s32.totalorder %v1447, 1
        %1450 = vrot.lane.b32.xlu0 %v459, 111
        %v1451 = vpop.permute.xlu0 %1450
        %1452 = vrot.lane.b32.xlu0 %v460, 111
        %v1453 = vpop.permute.xlu0 %1452
        %1454 = vrot.lane.b32.xlu0 0.0, 111
        %v1455 = vpop.permute.xlu0 %1454
        %1456 = vrot.lane.b32.xlu0 %v461, 111
        %v1457 = vpop.permute.xlu0 %1456
        %1458 = vrot.lane.b32.xlu0 %v462, 111
        %v1459 = vpop.permute.xlu0 %1458
        %1460 = vrot.lane.b32.xlu0 %v463, 111
        %v1461 = vpop.permute.xlu0 %1460
        %1462 = vrot.lane.b32.xlu0 %v464, 111
        %v1463 = vpop.permute.xlu0 %1462
        %1464 = vrot.lane.b32.xlu0 %v465, 111
        %v1465 = vpop.permute.xlu0 %1464
        %1466 = vrot.lane.b32.xlu0 %v466, 111
        %v1467 = vpop.permute.xlu0 %1466
        %vm1468 = vcmask 908288
        %v1469 = vsel %vm1468, %v1451, %v1453
        %v1470 = vsel %vm1468, %v1453, %v1455
        %v1471 = vsel %vm1468, %v1457, %v1459
        %v1472 = vsel %vm1468, %v1459, %v1455
        %v1473 = vsel %vm1468, %v1461, %v1463
        %v1474 = vsel %vm1468, %v1463, %v1455
        %v1475 = vsel %vm1468, %v1465, %v1467
        %v1476 = vsel %vm1468, %v1467, %v1455
        %v1485 = vsel %vm1448, %v1469, 0.0
        %v1486 = vsel %vm1449, %v1470, 0.0
        %v1487 = vsel %vm1448, %v1471, 0.0
        %v1488 = vsel %vm1449, %v1472, 0.0
        %v1489 = vsel %vm1448, %v1473, 0.0
        %v1490 = vsel %vm1449, %v1474, 0.0
        %v1491 = vsel %vm1448, %v1475, 0.0
        %v1492 = vsel %vm1449, %v1476, 0.0
        %s1493 = scalar_lea.vmem %s4, 64
        %v1494 = vld [vmem:[%s1493] sm:$0xff]
        %v1496 = vsel %vm588, %v1494, 0
        %1498 = vmatprep.subr.mxu0 %v1486
        %1499 = vmatpush1.msra.mxu0 %v1485
        %1500 = vmatprep.subr.mxu0 %v1488
        %1501 = vmatpush1.msra.mxu0 %v1487
        %1502 = vmatprep.subr.mxu0 %v1490
        %1503 = vmatpush1.msra.mxu0 %v1489
        %1504 = vmatprep.subr.mxu0 %v1492
        %1505 = vmatpush1.msra.mxu0 %v1491
        %1506 = vmatprep.subr.mxu0 0.0
        %1507 = vmatpush1.msra.mxu0 0.0
        %1508 = vmatprep.subr.mxu0 0.0
        %1509 = vmatpush1.msra.mxu0 0.0
        %1510 = vmatprep.subr.mxu0 0.0
        %1511 = vmatpush1.msra.mxu0 0.0
        %1512 = vmatprep.subr.mxu0 0.0
        %1513 = vmatpush1.msra.mxu0 0.0
        %1514 = vmatprep.subr.mxu0 0.0
        %1515 = vmatpush1.msra.mxu0 0.0
        %1516 = vmatprep.subr.mxu0 0.0
        %1517 = vmatpush1.msra.mxu0 0.0
        %1518 = vmatprep.subr.mxu0 0.0
        %1519 = vmatpush1.msra.mxu0 0.0
        %1520 = vmatprep.subr.mxu0 0.0
        %1521 = vmatpush1.msra.mxu0 0.0
        %1522 = vmatprep.subr.mxu0 0.0
        %1523 = vmatpush1.msra.mxu0 0.0
        %1524 = vmatprep.subr.mxu0 0.0
        %1525 = vmatpush1.msra.mxu0 0.0
        %1526 = vmatprep.subr.mxu0 0.0
        %1527 = vmatpush1.msra.mxu0 0.0
        %1528 = vmatprep.subr.mxu0 0.0
        %1529 = vmatpush1.msra.mxu0 0.0
        %1530 = vmatprep.subr.mxu0 0.0
        %1531 = vmatpush1.msra.mxu0 0.0
        %1532 = vmatprep.subr.mxu0 0.0
        %1533 = vmatpush1.msra.mxu0 0.0
        %1534 = vmatprep.subr.mxu0 0.0
        %1535 = vmatpush1.msra.mxu0 0.0
        %1536 = vmatprep.subr.mxu0 0.0
        %1537 = vmatpush1.msra.mxu0 0.0
        %1538 = vmatprep.subr.mxu0 0.0
        %1539 = vmatpush1.msra.mxu0 0.0
        %1540 = vmatprep.subr.mxu0 0.0
        %1541 = vmatpush1.msra.mxu0 0.0
        %1542 = vmatprep.subr.mxu0 0.0
        %1543 = vmatpush1.msra.mxu0 0.0
        %1544 = vmatprep.subr.mxu0 0.0
        %1545 = vmatpush1.msra.mxu0 0.0
        %1546 = vmatprep.subr.mxu0 0.0
        %1547 = vmatpush1.msra.mxu0 0.0
        %1548 = vmatprep.subr.mxu0 0.0
        %1549 = vmatpush1.msra.mxu0 0.0
        %1550 = vmatprep.subr.mxu0 0.0
        %1551 = vmatpush1.msra.mxu0 0.0
        %1552 = vmatprep.subr.mxu0 0.0
        %1553 = vmatpush1.msra.mxu0 0.0
        %1554 = vmatprep.subr.mxu0 0.0
        %1555 = vmatpush1.msra.mxu0 0.0
        %1556 = vmatprep.subr.mxu0 0.0
        %1557 = vmatpush1.msra.mxu0 0.0
        %1558 = vmatprep.subr.mxu0 0.0
        %1559 = vmatpush1.msra.mxu0 0.0
        %1560 = vmatprep.subr.mxu0 0.0
        %1561 = vmatpush1.msra.mxu0 0.0
        %1562 = vmatprep.mubr.f32.mxu0 0.0
        %1563 = vmatmul.mubr.f32.gmra.mrb[0].mxu0 %v1496
        %v1564 = vpop.f32.mrb[0].mxu0
        %v1565 = vadd.f32 0.0, %v1564
        %v1566 = vpop.f32.mrb[0].mxu0
        %v1567 = vadd.f32 0.0, %v1566
        %1568 = vdwg.mxu0
        %v1569 = vadd.f32 %v1442, %v1565
        %v1570 = vadd.f32 %v1443, %v1567
        %v1571 = vld [vmem:[%s5] sm:$0xff]
        %1573 = vset.pattern.permute.xlu0 0
        %1574 = vperm.xlu0 %1573, %v1571
        %v1575 = vpop.permute.xlu0 %1574
        %v1577 = vadd.f32 %v1569, %v1575
        %v1578 = vadd.f32 %v1570, %v1575
        %v1581 = vcombine.low %v1577, %v1578
        %v1583 = vmul.f32 %v313, %v1581
        %v1584 = vcombine.high %v1577, %v1578
        %v1586 = vadd.f32 %v1583, %v1584
        %1587 = vst [vmem:[%s259] sm:$0xff] %v1586
        %s1588 = sand.u32 %s164, 1
        %s1589 = scalar_lea.sflag [#allocation3], %s1588
        %s1590 = sand.u32 %s164, 1
        %s1591 = smul.addr %s1590, 8
        %s1592 = scalar_lea.vmem [#allocation2], %s1591
        // Predicated region
        $region45: #{tpu_custom_call.1} parent=43 // pred_check
          %p1593 = pneg %p174
        $region46: #{tpu_custom_call.1} parent=43 // pred_check_branch
          %1595 = sbr.rel (%p1593) target = $region48
        $region47: #{tpu_custom_call.1} parent=43 // pred_region
          %s1597 = ssub.s32 128, 128
          %1598 = vsyncadd %s1589, %s1597
          %s1599 = smul.addr %s20, 2
          %s1600 = smul.addr %s1599, 64
          %s1601 = scalar_lea.hbm %s6, %s1600
          %s1603 = sshll.u32 %s1592, 4
          %s1604 = int_to_ptr.vmem [resolvable:$true] %s1603
          %1606 = dma.vmem_to_hbm [thread:$0]  %s1604, 128, %s1601, %s1589
        $region48: #{tpu_custom_call.1} parent=43 // pred_fallthru
          _
      $region44: #{tpu_custom_call.1} parent=5 // pred_fallthru
        _
      %p1607 = scmp.le.s32.totalorder 2, %s15
      // Predicated region
      $region49: #{tpu_custom_call.1} parent=5 // pred_check
        %p1608 = pneg %p1607
      $region50: #{tpu_custom_call.1} parent=5 // pred_check_branch
        %1610 = sbr.rel (%p1608) target = $region52
      $region51: #{tpu_custom_call.1} parent=5 // pred_region
        %s1611 = ssub.s32 %s15, 2
        // Predicated region
        $region53: #{tpu_custom_call.1} parent=51 // pred_check
          %p1612 = pneg %p180
        $region54: #{tpu_custom_call.1} parent=51 // pred_check_branch
          %1614 = sbr.rel (%p1612) target = $region56
        $region55: #{tpu_custom_call.1} parent=51 // pred_region
          %s1615 = sand.u32 %s165, 1
          %s1616 = scalar_lea.sflag [#allocation3], %s1615
          %s1617 = sand.u32 %s165, 1
          %s1618 = smul.addr %s1617, 8
          %s1619 = scalar_lea.vmem [#allocation2], %s1618
          %1620 = dma.done %s1616, 128
        $region56: #{tpu_custom_call.1} parent=51 // pred_fallthru
          _
      $region52: #{tpu_custom_call.1} parent=5 // pred_fallthru
        _
    $region6: #{tpu_custom_call.1} parent=1 // loop_footer
      %s19 = sadd.s32 1, %s15
    $region7: #{tpu_custom_call.1} parent=1 // loop_footer_branch
      %14 = sbr.rel target = $region3
    $region8: #{tpu_custom_call.1} parent=1 // loop_exit
      _
    %1621 = vsyncpa [#allocation3], 1
    %s1622 = scalar_lea.sflag [#allocation3], 1
    %1623 = vsyncpa %s1622, 1

</llo_original>
